<compile_context>
chip_gen: v6e
topology: v6e:2x2x1
jax: 0.10.0
libtpu: 0.0.40
codegen_flags: <defaults>
</compile_context>

<pallas_src>
import jax
import jax.numpy as jnp
from jax.experimental import pallas as pl
from jax.experimental.pallas import tpu as pltpu

N_HIDDEN = 8
HIDDEN = 10
B_INIT = -0.2
EPS = 1e-5
ACTIVATION = jnp.tanh


# ---------------------------------------------------------------------------
# Shared math helpers (used by BOTH the Pallas kernel and the pure-JAX reference
# so that they follow the identical f32 operation order).
# Layout: (features, batch) -- batch is the last / lane axis.
# ---------------------------------------------------------------------------
def _bn_t(x, gamma, beta):
    """BatchNorm1d, training mode, transposed layout.

    x: (F, N); gamma/beta: (F, 1).  Batch mean, biased variance, eps=1e-5.
    One-pass stats so the two lane reductions are independent.
    """
    inv_n = 1.0 / x.shape[1]
    mean = jnp.sum(x, axis=1, keepdims=True) * inv_n
    msq = jnp.sum(x * x, axis=1, keepdims=True) * inv_n
    var = msq - mean * mean
    inv = jax.lax.rsqrt(var + EPS)
    return (x - mean) * (inv * gamma) + beta


def _linear_t(w, h):
    """y = W @ h via VPU broadcast-FMAs (no MXU).  w: (out, in), h: (in, N).  No bias."""
    acc = w[:, 0:1] * h[0:1, :]
    for k in range(1, w.shape[1]):
        acc = acc + w[:, k:k + 1] * h[k:k + 1, :]
    return acc


# ---------------------------------------------------------------------------
# Fused forward kernel (gridless; everything resident in VMEM).
# ---------------------------------------------------------------------------
def net_kernel(x_ref, bn_in_g_ref, bn_in_b_ref,
               w0_ref, wh_ref, bh_ref,
               bn_g_ref, bn_b_ref,
               wp_ref, bp_ref,
               out_ref, li0_ref, li_ref, pa_ref):
    x = x_ref[...]                                            # (1, N), batch on lanes

    # input batch-norm (pre_activation[0] is just x; handled by the wrapper)
    xb = _bn_t(x, bn_in_g_ref[...], bn_in_b_ref[...])         # (1, N)
    li0_ref[...] = xb

    h = xb
    for i in range(N_HIDDEN):                                 # static unroll (8 layers)
        w = w0_ref[...] if i == 0 else wh_ref[i - 1]          # (10, 1) / (10, 10)
        lin = _linear_t(w, h)                                 # (10, N), bias-free
        pa_ref[i] = lin + bh_ref[i]                           # bias only on the stored copy
        hb = _bn_t(lin, bn_g_ref[i], bn_b_ref[i])             # BN is bias-invariant
        h = ACTIVATION(hb)                                    # (10, N)
        li_ref[i] = h

    # predict: Linear(10, 1)  ->  (1, N) via multiply + sublane reduction
    out_ref[...] = jnp.sum(wp_ref[...] * h, axis=0, keepdims=True) + bp_ref[...]


# ---------------------------------------------------------------------------
# Parameters (PyTorch init: weight ~ N(0, 0.1), bias = B_INIT; BN gamma=1, beta=0).
# Linear weights kept in PyTorch (out_features, in_features) layout; predict weight
# stored transposed as a (10, 1) column for the sum-reduce projection.
# ---------------------------------------------------------------------------
def init_params(key):
    ks = jax.random.split(key, N_HIDDEN + 1)
    w0 = jax.random.normal(ks[0], (HIDDEN, 1), jnp.float32) * 0.1           # fc0.weight
    wh = jnp.stack([jax.random.normal(ks[i], (HIDDEN, HIDDEN), jnp.float32) * 0.1
                    for i in range(1, N_HIDDEN)], axis=0)                   # fc1..7 (7,10,10)
    bh = jnp.full((N_HIDDEN, HIDDEN, 1), B_INIT, jnp.float32)               # fc biases (cols)
    wp = (jax.random.normal(ks[N_HIDDEN], (1, HIDDEN), jnp.float32) * 0.1).T  # (10, 1)
    bp = jnp.full((1, 1), B_INIT, jnp.float32)
    bn_in_g = jnp.ones((1, 1), jnp.float32)
    bn_in_b = jnp.zeros((1, 1), jnp.float32)
    bn_g = jnp.ones((N_HIDDEN, HIDDEN, 1), jnp.float32)
    bn_b = jnp.zeros((N_HIDDEN, HIDDEN, 1), jnp.float32)
    return dict(w0=w0, wh=wh, bh=bh, wp=wp, bp=bp,
                bn_in_g=bn_in_g, bn_in_b=bn_in_b, bn_g=bn_g, bn_b=bn_b)


@jax.jit
def net_forward(x, params):
    N = x.shape[0]
    x_t = x.T                                                 # (1, N) lane-major batch
    vmem = pl.BlockSpec(memory_space=pltpu.MemorySpace.VMEM)
    out_t, li0_t, li_t, pa_t = pl.pallas_call(
        net_kernel,
        out_shape=(
            jax.ShapeDtypeStruct((1, N), jnp.float32),              # predict output
            jax.ShapeDtypeStruct((1, N), jnp.float32),              # layer_input[0] (post bn_input)
            jax.ShapeDtypeStruct((N_HIDDEN, HIDDEN, N), jnp.float32),  # layer_input[1:]
            jax.ShapeDtypeStruct((N_HIDDEN, HIDDEN, N), jnp.float32),  # pre_activation[1:]
        ),
        in_specs=[vmem] * 10,
        out_specs=(vmem, vmem, vmem, vmem),
    )(x_t, params['bn_in_g'], params['bn_in_b'],
      params['w0'], params['wh'], params['bh'],
      params['bn_g'], params['bn_b'],
      params['wp'], params['bp'])

    li = jnp.transpose(li_t, (0, 2, 1))                       # (8, N, 10)
    pa = jnp.transpose(pa_t, (0, 2, 1))                       # (8, N, 10)
    out = out_t.T                                             # (N, 1)
    layer_input = [li0_t.T] + [li[i] for i in range(N_HIDDEN)]
    pre_activation = [x] + [pa[i] for i in range(N_HIDDEN)]
    return out, layer_input, pre_activation


def net_forward_ref(x, params):
    """Pure-JAX reference (same math, no Pallas), matching the PyTorch forward."""
    x_t = x.T
    xb = _bn_t(x_t, params['bn_in_g'], params['bn_in_b'])
    pre_activation = [x]
    layer_input = [xb.T]
    h = xb
    for i in range(N_HIDDEN):
        w = params['w0'] if i == 0 else params['wh'][i - 1]
        lin = _linear_t(w, h)
        pre_activation.append((lin + params['bh'][i]).T)
        h = ACTIVATION(_bn_t(lin, params['bn_g'][i], params['bn_b'][i]))
        layer_input.append(h.T)
    out = (jnp.sum(params['wp'] * h, axis=0, keepdims=True) + params['bp']).T
    return out, layer_input, pre_activation


if __name__ == "__main__":
    key = jax.random.PRNGKey(0)
    kx, kp = jax.random.split(key)
    N = 32
    x = jax.random.normal(kx, (N, 1), jnp.float32) * 2.0
    params = init_params(kp)

    out, layer_input, pre_activation = net_forward(x, params)
    jax.block_until_ready(out)

    out_r, li_r, pa_r = net_forward_ref(x, params)
    assert out.shape == (N, 1)
    assert jnp.allclose(out, out_r, atol=1e-3, rtol=1e-3)
    for a, b in zip(layer_input, li_r):
        assert a.shape == b.shape
        assert jnp.allclose(a, b, atol=1e-3, rtol=1e-3)
    for a, b in zip(pre_activation, pa_r):
        assert a.shape == b.shape
        assert jnp.allclose(a, b, atol=1e-3, rtol=1e-3)

    print("KERNEL_OK")
</pallas_src>

<mosaic_0001>
module attributes {stable_mosaic.version = 11 : i64} {
  func.func @net_kernel(%arg0: memref<1x32xf32, #tpu.memory_space<vmem>>, %arg1: memref<1x1xf32, #tpu.memory_space<vmem>>, %arg2: memref<1x1xf32, #tpu.memory_space<vmem>>, %arg3: memref<10x1xf32, #tpu.memory_space<vmem>>, %arg4: memref<7x10x10xf32, #tpu.memory_space<vmem>>, %arg5: memref<8x10x1xf32, #tpu.memory_space<vmem>>, %arg6: memref<8x10x1xf32, #tpu.memory_space<vmem>>, %arg7: memref<8x10x1xf32, #tpu.memory_space<vmem>>, %arg8: memref<10x1xf32, #tpu.memory_space<vmem>>, %arg9: memref<1x1xf32, #tpu.memory_space<vmem>>, %arg10: memref<1x32xf32, #tpu.memory_space<vmem>>, %arg11: memref<1x32xf32, #tpu.memory_space<vmem>>, %arg12: memref<8x10x32xf32, #tpu.memory_space<vmem>>, %arg13: memref<8x10x32xf32, #tpu.memory_space<vmem>>) attributes {dimension_semantics = [], scalar_prefetch = 0 : i64, scratch_operands = 0 : i64, tpu.core_type = #tpu.core_type<tc>} {
    %c0 = arith.constant 0 : index
    %c0_0 = arith.constant 0 : index
    %0 = vector.load %arg0[%c0, %c0_0] : memref<1x32xf32, #tpu.memory_space<vmem>>, vector<1x32xf32>
    %c0_1 = arith.constant 0 : index
    %c0_2 = arith.constant 0 : index
    %1 = vector.load %arg1[%c0_1, %c0_2] : memref<1x1xf32, #tpu.memory_space<vmem>>, vector<1x1xf32>
    %c0_3 = arith.constant 0 : index
    %c0_4 = arith.constant 0 : index
    %2 = vector.load %arg2[%c0_3, %c0_4] : memref<1x1xf32, #tpu.memory_space<vmem>>, vector<1x1xf32>
    %cst = arith.constant dense<0.000000e+00> : vector<1xf32>
    %3 = vector.multi_reduction <add>, %0, %cst [1] : vector<1x32xf32> to vector<1xf32>
    %4 = vector.shape_cast %3 : vector<1xf32> to vector<1x1xf32>
    %cst_5 = arith.constant 3.125000e-02 : f32
    %5 = vector.broadcast %cst_5 : f32 to vector<1x1xf32>
    %6 = arith.mulf %4, %5 : vector<1x1xf32>
    %7 = arith.mulf %0, %0 : vector<1x32xf32>
    %cst_6 = arith.constant dense<0.000000e+00> : vector<1xf32>
    %8 = vector.multi_reduction <add>, %7, %cst_6 [1] : vector<1x32xf32> to vector<1xf32>
    %9 = vector.shape_cast %8 : vector<1xf32> to vector<1x1xf32>
    %cst_7 = arith.constant 3.125000e-02 : f32
    %10 = vector.broadcast %cst_7 : f32 to vector<1x1xf32>
    %11 = arith.mulf %9, %10 : vector<1x1xf32>
    %12 = arith.mulf %6, %6 : vector<1x1xf32>
    %13 = arith.subf %11, %12 : vector<1x1xf32>
    %cst_8 = arith.constant 9.99999974E-6 : f32
    %14 = vector.broadcast %cst_8 : f32 to vector<1x1xf32>
    %15 = arith.addf %13, %14 : vector<1x1xf32>
    %16 = math.rsqrt %15 : vector<1x1xf32>
    %17 = vector.broadcast %6 : vector<1x1xf32> to vector<1x32xf32>
    %18 = arith.subf %0, %17 : vector<1x32xf32>
    %19 = arith.mulf %16, %1 : vector<1x1xf32>
    %20 = vector.broadcast %19 : vector<1x1xf32> to vector<1x32xf32>
    %21 = arith.mulf %18, %20 : vector<1x32xf32>
    %22 = vector.broadcast %2 : vector<1x1xf32> to vector<1x32xf32>
    %23 = arith.addf %21, %22 : vector<1x32xf32>
    %c0_9 = arith.constant 0 : index
    %c0_10 = arith.constant 0 : index
    %24 = vector.load %arg11[%c0_9, %c0_10] : memref<1x32xf32, #tpu.memory_space<vmem>>, vector<1x32xf32>
    tpu.vector_store %arg11[%c0_9, %c0_10], %23 {strides = array<i32>} : memref<1x32xf32, #tpu.memory_space<vmem>>, vector<1x32xf32>,
    %c0_11 = arith.constant 0 : index
    %c0_12 = arith.constant 0 : index
    %25 = vector.load %arg3[%c0_11, %c0_12] : memref<10x1xf32, #tpu.memory_space<vmem>>, vector<10x1xf32>
    %26 = vector.broadcast %25 : vector<10x1xf32> to vector<10x32xf32>
    %27 = vector.broadcast %23 : vector<1x32xf32> to vector<10x32xf32>
    %28 = arith.mulf %26, %27 : vector<10x32xf32>
    %c0_13 = arith.constant 0 : index
    %c0_14 = arith.constant 0 : index
    %c0_15 = arith.constant 0 : index
    %29 = vector.load %arg5[%c0_13, %c0_14, %c0_15] : memref<8x10x1xf32, #tpu.memory_space<vmem>>, vector<1x10x1xf32>
    %30 = vector.shape_cast %29 : vector<1x10x1xf32> to vector<10x1xf32>
    %31 = vector.broadcast %30 : vector<10x1xf32> to vector<10x32xf32>
    %32 = arith.addf %28, %31 : vector<10x32xf32>
    %c0_16 = arith.constant 0 : index
    %c0_17 = arith.constant 0 : index
    %c0_18 = arith.constant 0 : index
    %33 = vector.load %arg13[%c0_16, %c0_17, %c0_18] : memref<8x10x32xf32, #tpu.memory_space<vmem>>, vector<1x10x32xf32>
    %34 = vector.shape_cast %33 : vector<1x10x32xf32> to vector<10x32xf32>
    %35 = vector.shape_cast %32 : vector<10x32xf32> to vector<1x10x32xf32>
    tpu.vector_store %arg13[%c0_16, %c0_17, %c0_18], %35 {strides = array<i32>} : memref<8x10x32xf32, #tpu.memory_space<vmem>>, vector<1x10x32xf32>,
    %c0_19 = arith.constant 0 : index
    %c0_20 = arith.constant 0 : index
    %c0_21 = arith.constant 0 : index
    %36 = vector.load %arg6[%c0_19, %c0_20, %c0_21] : memref<8x10x1xf32, #tpu.memory_space<vmem>>, vector<1x10x1xf32>
    %37 = vector.shape_cast %36 : vector<1x10x1xf32> to vector<10x1xf32>
    %c0_22 = arith.constant 0 : index
    %c0_23 = arith.constant 0 : index
    %c0_24 = arith.constant 0 : index
    %38 = vector.load %arg7[%c0_22, %c0_23, %c0_24] : memref<8x10x1xf32, #tpu.memory_space<vmem>>, vector<1x10x1xf32>
    %39 = vector.shape_cast %38 : vector<1x10x1xf32> to vector<10x1xf32>
    %cst_25 = arith.constant dense<0.000000e+00> : vector<10xf32>
    %40 = vector.multi_reduction <add>, %28, %cst_25 [1] : vector<10x32xf32> to vector<10xf32>
    %41 = vector.shape_cast %40 : vector<10xf32> to vector<10x1xf32>
    %cst_26 = arith.constant 3.125000e-02 : f32
    %42 = vector.broadcast %cst_26 : f32 to vector<10x1xf32>
    %43 = arith.mulf %41, %42 : vector<10x1xf32>
    %44 = arith.mulf %28, %28 : vector<10x32xf32>
    %cst_27 = arith.constant dense<0.000000e+00> : vector<10xf32>
    %45 = vector.multi_reduction <add>, %44, %cst_27 [1] : vector<10x32xf32> to vector<10xf32>
    %46 = vector.shape_cast %45 : vector<10xf32> to vector<10x1xf32>
    %cst_28 = arith.constant 3.125000e-02 : f32
    %47 = vector.broadcast %cst_28 : f32 to vector<10x1xf32>
    %48 = arith.mulf %46, %47 : vector<10x1xf32>
    %49 = arith.mulf %43, %43 : vector<10x1xf32>
    %50 = arith.subf %48, %49 : vector<10x1xf32>
    %cst_29 = arith.constant 9.99999974E-6 : f32
    %51 = vector.broadcast %cst_29 : f32 to vector<10x1xf32>
    %52 = arith.addf %50, %51 : vector<10x1xf32>
    %53 = math.rsqrt %52 : vector<10x1xf32>
    %54 = vector.broadcast %43 : vector<10x1xf32> to vector<10x32xf32>
    %55 = arith.subf %28, %54 : vector<10x32xf32>
    %56 = arith.mulf %53, %37 : vector<10x1xf32>
    %57 = vector.broadcast %56 : vector<10x1xf32> to vector<10x32xf32>
    %58 = arith.mulf %55, %57 : vector<10x32xf32>
    %59 = vector.broadcast %39 : vector<10x1xf32> to vector<10x32xf32>
    %60 = arith.addf %58, %59 : vector<10x32xf32>
    %61 = math.tanh %60 : vector<10x32xf32>
    %c0_30 = arith.constant 0 : index
    %c0_31 = arith.constant 0 : index
    %c0_32 = arith.constant 0 : index
    %62 = vector.load %arg12[%c0_30, %c0_31, %c0_32] : memref<8x10x32xf32, #tpu.memory_space<vmem>>, vector<1x10x32xf32>
    %63 = vector.shape_cast %62 : vector<1x10x32xf32> to vector<10x32xf32>
    %64 = vector.shape_cast %61 : vector<10x32xf32> to vector<1x10x32xf32>
    tpu.vector_store %arg12[%c0_30, %c0_31, %c0_32], %64 {strides = array<i32>} : memref<8x10x32xf32, #tpu.memory_space<vmem>>, vector<1x10x32xf32>,
    %c0_33 = arith.constant 0 : index
    %c0_34 = arith.constant 0 : index
    %c0_35 = arith.constant 0 : index
    %65 = vector.load %arg4[%c0_33, %c0_34, %c0_35] : memref<7x10x10xf32, #tpu.memory_space<vmem>>, vector<1x10x10xf32>
    %66 = vector.shape_cast %65 : vector<1x10x10xf32> to vector<10x10xf32>
    %67 = vector.extract_strided_slice %66 {offsets = [0, 0], sizes = [10, 1], strides = [1, 1]} : vector<10x10xf32> to vector<10x1xf32>
    %68 = vector.extract_strided_slice %61 {offsets = [0, 0], sizes = [1, 32], strides = [1, 1]} : vector<10x32xf32> to vector<1x32xf32>
    %69 = vector.broadcast %67 : vector<10x1xf32> to vector<10x32xf32>
    %70 = vector.broadcast %68 : vector<1x32xf32> to vector<10x32xf32>
    %71 = arith.mulf %69, %70 : vector<10x32xf32>
    %72 = vector.extract_strided_slice %66 {offsets = [0, 1], sizes = [10, 1], strides = [1, 1]} : vector<10x10xf32> to vector<10x1xf32>
    %73 = vector.extract_strided_slice %61 {offsets = [1, 0], sizes = [1, 32], strides = [1, 1]} : vector<10x32xf32> to vector<1x32xf32>
    %74 = vector.broadcast %72 : vector<10x1xf32> to vector<10x32xf32>
    %75 = vector.broadcast %73 : vector<1x32xf32> to vector<10x32xf32>
    %76 = arith.mulf %74, %75 : vector<10x32xf32>
    %77 = arith.addf %71, %76 : vector<10x32xf32>
    %78 = vector.extract_strided_slice %66 {offsets = [0, 2], sizes = [10, 1], strides = [1, 1]} : vector<10x10xf32> to vector<10x1xf32>
    %79 = vector.extract_strided_slice %61 {offsets = [2, 0], sizes = [1, 32], strides = [1, 1]} : vector<10x32xf32> to vector<1x32xf32>
    %80 = vector.broadcast %78 : vector<10x1xf32> to vector<10x32xf32>
    %81 = vector.broadcast %79 : vector<1x32xf32> to vector<10x32xf32>
    %82 = arith.mulf %80, %81 : vector<10x32xf32>
    %83 = arith.addf %77, %82 : vector<10x32xf32>
    %84 = vector.extract_strided_slice %66 {offsets = [0, 3], sizes = [10, 1], strides = [1, 1]} : vector<10x10xf32> to vector<10x1xf32>
    %85 = vector.extract_strided_slice %61 {offsets = [3, 0], sizes = [1, 32], strides = [1, 1]} : vector<10x32xf32> to vector<1x32xf32>
    %86 = vector.broadcast %84 : vector<10x1xf32> to vector<10x32xf32>
    %87 = vector.broadcast %85 : vector<1x32xf32> to vector<10x32xf32>
    %88 = arith.mulf %86, %87 : vector<10x32xf32>
    %89 = arith.addf %83, %88 : vector<10x32xf32>
    %90 = vector.extract_strided_slice %66 {offsets = [0, 4], sizes = [10, 1], strides = [1, 1]} : vector<10x10xf32> to vector<10x1xf32>
    %91 = vector.extract_strided_slice %61 {offsets = [4, 0], sizes = [1, 32], strides = [1, 1]} : vector<10x32xf32> to vector<1x32xf32>
    %92 = vector.broadcast %90 : vector<10x1xf32> to vector<10x32xf32>
    %93 = vector.broadcast %91 : vector<1x32xf32> to vector<10x32xf32>
    %94 = arith.mulf %92, %93 : vector<10x32xf32>
    %95 = arith.addf %89, %94 : vector<10x32xf32>
    %96 = vector.extract_strided_slice %66 {offsets = [0, 5], sizes = [10, 1], strides = [1, 1]} : vector<10x10xf32> to vector<10x1xf32>
    %97 = vector.extract_strided_slice %61 {offsets = [5, 0], sizes = [1, 32], strides = [1, 1]} : vector<10x32xf32> to vector<1x32xf32>
    %98 = vector.broadcast %96 : vector<10x1xf32> to vector<10x32xf32>
    %99 = vector.broadcast %97 : vector<1x32xf32> to vector<10x32xf32>
    %100 = arith.mulf %98, %99 : vector<10x32xf32>
    %101 = arith.addf %95, %100 : vector<10x32xf32>
    %102 = vector.extract_strided_slice %66 {offsets = [0, 6], sizes = [10, 1], strides = [1, 1]} : vector<10x10xf32> to vector<10x1xf32>
    %103 = vector.extract_strided_slice %61 {offsets = [6, 0], sizes = [1, 32], strides = [1, 1]} : vector<10x32xf32> to vector<1x32xf32>
    %104 = vector.broadcast %102 : vector<10x1xf32> to vector<10x32xf32>
    %105 = vector.broadcast %103 : vector<1x32xf32> to vector<10x32xf32>
    %106 = arith.mulf %104, %105 : vector<10x32xf32>
    %107 = arith.addf %101, %106 : vector<10x32xf32>
    %108 = vector.extract_strided_slice %66 {offsets = [0, 7], sizes = [10, 1], strides = [1, 1]} : vector<10x10xf32> to vector<10x1xf32>
    %109 = vector.extract_strided_slice %61 {offsets = [7, 0], sizes = [1, 32], strides = [1, 1]} : vector<10x32xf32> to vector<1x32xf32>
    %110 = vector.broadcast %108 : vector<10x1xf32> to vector<10x32xf32>
    %111 = vector.broadcast %109 : vector<1x32xf32> to vector<10x32xf32>
    %112 = arith.mulf %110, %111 : vector<10x32xf32>
    %113 = arith.addf %107, %112 : vector<10x32xf32>
    %114 = vector.extract_strided_slice %66 {offsets = [0, 8], sizes = [10, 1], strides = [1, 1]} : vector<10x10xf32> to vector<10x1xf32>
    %115 = vector.extract_strided_slice %61 {offsets = [8, 0], sizes = [1, 32], strides = [1, 1]} : vector<10x32xf32> to vector<1x32xf32>
    %116 = vector.broadcast %114 : vector<10x1xf32> to vector<10x32xf32>
    %117 = vector.broadcast %115 : vector<1x32xf32> to vector<10x32xf32>
    %118 = arith.mulf %116, %117 : vector<10x32xf32>
    %119 = arith.addf %113, %118 : vector<10x32xf32>
    %120 = vector.extract_strided_slice %66 {offsets = [0, 9], sizes = [10, 1], strides = [1, 1]} : vector<10x10xf32> to vector<10x1xf32>
    %121 = vector.extract_strided_slice %61 {offsets = [9, 0], sizes = [1, 32], strides = [1, 1]} : vector<10x32xf32> to vector<1x32xf32>
    %122 = vector.broadcast %120 : vector<10x1xf32> to vector<10x32xf32>
    %123 = vector.broadcast %121 : vector<1x32xf32> to vector<10x32xf32>
    %124 = arith.mulf %122, %123 : vector<10x32xf32>
    %125 = arith.addf %119, %124 : vector<10x32xf32>
    %c1 = arith.constant 1 : index
    %c0_36 = arith.constant 0 : index
    %c0_37 = arith.constant 0 : index
    %126 = vector.load %arg5[%c1, %c0_36, %c0_37] : memref<8x10x1xf32, #tpu.memory_space<vmem>>, vector<1x10x1xf32>
    %127 = vector.shape_cast %126 : vector<1x10x1xf32> to vector<10x1xf32>
    %128 = vector.broadcast %127 : vector<10x1xf32> to vector<10x32xf32>
    %129 = arith.addf %125, %128 : vector<10x32xf32>
    %c1_38 = arith.constant 1 : index
    %c0_39 = arith.constant 0 : index
    %c0_40 = arith.constant 0 : index
    %130 = vector.load %arg13[%c1_38, %c0_39, %c0_40] : memref<8x10x32xf32, #tpu.memory_space<vmem>>, vector<1x10x32xf32>
    %131 = vector.shape_cast %130 : vector<1x10x32xf32> to vector<10x32xf32>
    %132 = vector.shape_cast %129 : vector<10x32xf32> to vector<1x10x32xf32>
    tpu.vector_store %arg13[%c1_38, %c0_39, %c0_40], %132 {strides = array<i32>} : memref<8x10x32xf32, #tpu.memory_space<vmem>>, vector<1x10x32xf32>,
    %c1_41 = arith.constant 1 : index
    %c0_42 = arith.constant 0 : index
    %c0_43 = arith.constant 0 : index
    %133 = vector.load %arg6[%c1_41, %c0_42, %c0_43] : memref<8x10x1xf32, #tpu.memory_space<vmem>>, vector<1x10x1xf32>
    %134 = vector.shape_cast %133 : vector<1x10x1xf32> to vector<10x1xf32>
    %c1_44 = arith.constant 1 : index
    %c0_45 = arith.constant 0 : index
    %c0_46 = arith.constant 0 : index
    %135 = vector.load %arg7[%c1_44, %c0_45, %c0_46] : memref<8x10x1xf32, #tpu.memory_space<vmem>>, vector<1x10x1xf32>
    %136 = vector.shape_cast %135 : vector<1x10x1xf32> to vector<10x1xf32>
    %cst_47 = arith.constant dense<0.000000e+00> : vector<10xf32>
    %137 = vector.multi_reduction <add>, %125, %cst_47 [1] : vector<10x32xf32> to vector<10xf32>
    %138 = vector.shape_cast %137 : vector<10xf32> to vector<10x1xf32>
    %cst_48 = arith.constant 3.125000e-02 : f32
    %139 = vector.broadcast %cst_48 : f32 to vector<10x1xf32>
    %140 = arith.mulf %138, %139 : vector<10x1xf32>
    %141 = arith.mulf %125, %125 : vector<10x32xf32>
    %cst_49 = arith.constant dense<0.000000e+00> : vector<10xf32>
    %142 = vector.multi_reduction <add>, %141, %cst_49 [1] : vector<10x32xf32> to vector<10xf32>
    %143 = vector.shape_cast %142 : vector<10xf32> to vector<10x1xf32>
    %cst_50 = arith.constant 3.125000e-02 : f32
    %144 = vector.broadcast %cst_50 : f32 to vector<10x1xf32>
    %145 = arith.mulf %143, %144 : vector<10x1xf32>
    %146 = arith.mulf %140, %140 : vector<10x1xf32>
    %147 = arith.subf %145, %146 : vector<10x1xf32>
    %cst_51 = arith.constant 9.99999974E-6 : f32
    %148 = vector.broadcast %cst_51 : f32 to vector<10x1xf32>
    %149 = arith.addf %147, %148 : vector<10x1xf32>
    %150 = math.rsqrt %149 : vector<10x1xf32>
    %151 = vector.broadcast %140 : vector<10x1xf32> to vector<10x32xf32>
    %152 = arith.subf %125, %151 : vector<10x32xf32>
    %153 = arith.mulf %150, %134 : vector<10x1xf32>
    %154 = vector.broadcast %153 : vector<10x1xf32> to vector<10x32xf32>
    %155 = arith.mulf %152, %154 : vector<10x32xf32>
    %156 = vector.broadcast %136 : vector<10x1xf32> to vector<10x32xf32>
    %157 = arith.addf %155, %156 : vector<10x32xf32>
    %158 = math.tanh %157 : vector<10x32xf32>
    %c1_52 = arith.constant 1 : index
    %c0_53 = arith.constant 0 : index
    %c0_54 = arith.constant 0 : index
    %159 = vector.load %arg12[%c1_52, %c0_53, %c0_54] : memref<8x10x32xf32, #tpu.memory_space<vmem>>, vector<1x10x32xf32>
    %160 = vector.shape_cast %159 : vector<1x10x32xf32> to vector<10x32xf32>
    %161 = vector.shape_cast %158 : vector<10x32xf32> to vector<1x10x32xf32>
    tpu.vector_store %arg12[%c1_52, %c0_53, %c0_54], %161 {strides = array<i32>} : memref<8x10x32xf32, #tpu.memory_space<vmem>>, vector<1x10x32xf32>,
    %c1_55 = arith.constant 1 : index
    %c0_56 = arith.constant 0 : index
    %c0_57 = arith.constant 0 : index
    %162 = vector.load %arg4[%c1_55, %c0_56, %c0_57] : memref<7x10x10xf32, #tpu.memory_space<vmem>>, vector<1x10x10xf32>
    %163 = vector.shape_cast %162 : vector<1x10x10xf32> to vector<10x10xf32>
    %164 = vector.extract_strided_slice %163 {offsets = [0, 0], sizes = [10, 1], strides = [1, 1]} : vector<10x10xf32> to vector<10x1xf32>
    %165 = vector.extract_strided_slice %158 {offsets = [0, 0], sizes = [1, 32], strides = [1, 1]} : vector<10x32xf32> to vector<1x32xf32>
    %166 = vector.broadcast %164 : vector<10x1xf32> to vector<10x32xf32>
    %167 = vector.broadcast %165 : vector<1x32xf32> to vector<10x32xf32>
    %168 = arith.mulf %166, %167 : vector<10x32xf32>
    %169 = vector.extract_strided_slice %163 {offsets = [0, 1], sizes = [10, 1], strides = [1, 1]} : vector<10x10xf32> to vector<10x1xf32>
    %170 = vector.extract_strided_slice %158 {offsets = [1, 0], sizes = [1, 32], strides = [1, 1]} : vector<10x32xf32> to vector<1x32xf32>
    %171 = vector.broadcast %169 : vector<10x1xf32> to vector<10x32xf32>
    %172 = vector.broadcast %170 : vector<1x32xf32> to vector<10x32xf32>
    %173 = arith.mulf %171, %172 : vector<10x32xf32>
    %174 = arith.addf %168, %173 : vector<10x32xf32>
    %175 = vector.extract_strided_slice %163 {offsets = [0, 2], sizes = [10, 1], strides = [1, 1]} : vector<10x10xf32> to vector<10x1xf32>
    %176 = vector.extract_strided_slice %158 {offsets = [2, 0], sizes = [1, 32], strides = [1, 1]} : vector<10x32xf32> to vector<1x32xf32>
    %177 = vector.broadcast %175 : vector<10x1xf32> to vector<10x32xf32>
    %178 = vector.broadcast %176 : vector<1x32xf32> to vector<10x32xf32>
    %179 = arith.mulf %177, %178 : vector<10x32xf32>
    %180 = arith.addf %174, %179 : vector<10x32xf32>
    %181 = vector.extract_strided_slice %163 {offsets = [0, 3], sizes = [10, 1], strides = [1, 1]} : vector<10x10xf32> to vector<10x1xf32>
    %182 = vector.extract_strided_slice %158 {offsets = [3, 0], sizes = [1, 32], strides = [1, 1]} : vector<10x32xf32> to vector<1x32xf32>
    %183 = vector.broadcast %181 : vector<10x1xf32> to vector<10x32xf32>
    %184 = vector.broadcast %182 : vector<1x32xf32> to vector<10x32xf32>
    %185 = arith.mulf %183, %184 : vector<10x32xf32>
    %186 = arith.addf %180, %185 : vector<10x32xf32>
    %187 = vector.extract_strided_slice %163 {offsets = [0, 4], sizes = [10, 1], strides = [1, 1]} : vector<10x10xf32> to vector<10x1xf32>
    %188 = vector.extract_strided_slice %158 {offsets = [4, 0], sizes = [1, 32], strides = [1, 1]} : vector<10x32xf32> to vector<1x32xf32>
    %189 = vector.broadcast %187 : vector<10x1xf32> to vector<10x32xf32>
    %190 = vector.broadcast %188 : vector<1x32xf32> to vector<10x32xf32>
    %191 = arith.mulf %189, %190 : vector<10x32xf32>
    %192 = arith.addf %186, %191 : vector<10x32xf32>
    %193 = vector.extract_strided_slice %163 {offsets = [0, 5], sizes = [10, 1], strides = [1, 1]} : vector<10x10xf32> to vector<10x1xf32>
    %194 = vector.extract_strided_slice %158 {offsets = [5, 0], sizes = [1, 32], strides = [1, 1]} : vector<10x32xf32> to vector<1x32xf32>
    %195 = vector.broadcast %193 : vector<10x1xf32> to vector<10x32xf32>
    %196 = vector.broadcast %194 : vector<1x32xf32> to vector<10x32xf32>
    %197 = arith.mulf %195, %196 : vector<10x32xf32>
    %198 = arith.addf %192, %197 : vector<10x32xf32>
    %199 = vector.extract_strided_slice %163 {offsets = [0, 6], sizes = [10, 1], strides = [1, 1]} : vector<10x10xf32> to vector<10x1xf32>
    %200 = vector.extract_strided_slice %158 {offsets = [6, 0], sizes = [1, 32], strides = [1, 1]} : vector<10x32xf32> to vector<1x32xf32>
    %201 = vector.broadcast %199 : vector<10x1xf32> to vector<10x32xf32>
    %202 = vector.broadcast %200 : vector<1x32xf32> to vector<10x32xf32>
    %203 = arith.mulf %201, %202 : vector<10x32xf32>
    %204 = arith.addf %198, %203 : vector<10x32xf32>
    %205 = vector.extract_strided_slice %163 {offsets = [0, 7], sizes = [10, 1], strides = [1, 1]} : vector<10x10xf32> to vector<10x1xf32>
    %206 = vector.extract_strided_slice %158 {offsets = [7, 0], sizes = [1, 32], strides = [1, 1]} : vector<10x32xf32> to vector<1x32xf32>
    %207 = vector.broadcast %205 : vector<10x1xf32> to vector<10x32xf32>
    %208 = vector.broadcast %206 : vector<1x32xf32> to vector<10x32xf32>
    %209 = arith.mulf %207, %208 : vector<10x32xf32>
    %210 = arith.addf %204, %209 : vector<10x32xf32>
    %211 = vector.extract_strided_slice %163 {offsets = [0, 8], sizes = [10, 1], strides = [1, 1]} : vector<10x10xf32> to vector<10x1xf32>
    %212 = vector.extract_strided_slice %158 {offsets = [8, 0], sizes = [1, 32], strides = [1, 1]} : vector<10x32xf32> to vector<1x32xf32>
    %213 = vector.broadcast %211 : vector<10x1xf32> to vector<10x32xf32>
    %214 = vector.broadcast %212 : vector<1x32xf32> to vector<10x32xf32>
    %215 = arith.mulf %213, %214 : vector<10x32xf32>
    %216 = arith.addf %210, %215 : vector<10x32xf32>
    %217 = vector.extract_strided_slice %163 {offsets = [0, 9], sizes = [10, 1], strides = [1, 1]} : vector<10x10xf32> to vector<10x1xf32>
    %218 = vector.extract_strided_slice %158 {offsets = [9, 0], sizes = [1, 32], strides = [1, 1]} : vector<10x32xf32> to vector<1x32xf32>
    %219 = vector.broadcast %217 : vector<10x1xf32> to vector<10x32xf32>
    %220 = vector.broadcast %218 : vector<1x32xf32> to vector<10x32xf32>
    %221 = arith.mulf %219, %220 : vector<10x32xf32>
    %222 = arith.addf %216, %221 : vector<10x32xf32>
    %c2 = arith.constant 2 : index
    %c0_58 = arith.constant 0 : index
    %c0_59 = arith.constant 0 : index
    %223 = vector.load %arg5[%c2, %c0_58, %c0_59] : memref<8x10x1xf32, #tpu.memory_space<vmem>>, vector<1x10x1xf32>
    %224 = vector.shape_cast %223 : vector<1x10x1xf32> to vector<10x1xf32>
    %225 = vector.broadcast %224 : vector<10x1xf32> to vector<10x32xf32>
    %226 = arith.addf %222, %225 : vector<10x32xf32>
    %c2_60 = arith.constant 2 : index
    %c0_61 = arith.constant 0 : index
    %c0_62 = arith.constant 0 : index
    %227 = vector.load %arg13[%c2_60, %c0_61, %c0_62] : memref<8x10x32xf32, #tpu.memory_space<vmem>>, vector<1x10x32xf32>
    %228 = vector.shape_cast %227 : vector<1x10x32xf32> to vector<10x32xf32>
    %229 = vector.shape_cast %226 : vector<10x32xf32> to vector<1x10x32xf32>
    tpu.vector_store %arg13[%c2_60, %c0_61, %c0_62], %229 {strides = array<i32>} : memref<8x10x32xf32, #tpu.memory_space<vmem>>, vector<1x10x32xf32>,
    %c2_63 = arith.constant 2 : index
    %c0_64 = arith.constant 0 : index
    %c0_65 = arith.constant 0 : index
    %230 = vector.load %arg6[%c2_63, %c0_64, %c0_65] : memref<8x10x1xf32, #tpu.memory_space<vmem>>, vector<1x10x1xf32>
    %231 = vector.shape_cast %230 : vector<1x10x1xf32> to vector<10x1xf32>
    %c2_66 = arith.constant 2 : index
    %c0_67 = arith.constant 0 : index
    %c0_68 = arith.constant 0 : index
    %232 = vector.load %arg7[%c2_66, %c0_67, %c0_68] : memref<8x10x1xf32, #tpu.memory_space<vmem>>, vector<1x10x1xf32>
    %233 = vector.shape_cast %232 : vector<1x10x1xf32> to vector<10x1xf32>
    %cst_69 = arith.constant dense<0.000000e+00> : vector<10xf32>
    %234 = vector.multi_reduction <add>, %222, %cst_69 [1] : vector<10x32xf32> to vector<10xf32>
    %235 = vector.shape_cast %234 : vector<10xf32> to vector<10x1xf32>
    %cst_70 = arith.constant 3.125000e-02 : f32
    %236 = vector.broadcast %cst_70 : f32 to vector<10x1xf32>
    %237 = arith.mulf %235, %236 : vector<10x1xf32>
    %238 = arith.mulf %222, %222 : vector<10x32xf32>
    %cst_71 = arith.constant dense<0.000000e+00> : vector<10xf32>
    %239 = vector.multi_reduction <add>, %238, %cst_71 [1] : vector<10x32xf32> to vector<10xf32>
    %240 = vector.shape_cast %239 : vector<10xf32> to vector<10x1xf32>
    %cst_72 = arith.constant 3.125000e-02 : f32
    %241 = vector.broadcast %cst_72 : f32 to vector<10x1xf32>
    %242 = arith.mulf %240, %241 : vector<10x1xf32>
    %243 = arith.mulf %237, %237 : vector<10x1xf32>
    %244 = arith.subf %242, %243 : vector<10x1xf32>
    %cst_73 = arith.constant 9.99999974E-6 : f32
    %245 = vector.broadcast %cst_73 : f32 to vector<10x1xf32>
    %246 = arith.addf %244, %245 : vector<10x1xf32>
    %247 = math.rsqrt %246 : vector<10x1xf32>
    %248 = vector.broadcast %237 : vector<10x1xf32> to vector<10x32xf32>
    %249 = arith.subf %222, %248 : vector<10x32xf32>
    %250 = arith.mulf %247, %231 : vector<10x1xf32>
    %251 = vector.broadcast %250 : vector<10x1xf32> to vector<10x32xf32>
    %252 = arith.mulf %249, %251 : vector<10x32xf32>
    %253 = vector.broadcast %233 : vector<10x1xf32> to vector<10x32xf32>
    %254 = arith.addf %252, %253 : vector<10x32xf32>
    %255 = math.tanh %254 : vector<10x32xf32>
    %c2_74 = arith.constant 2 : index
    %c0_75 = arith.constant 0 : index
    %c0_76 = arith.constant 0 : index
    %256 = vector.load %arg12[%c2_74, %c0_75, %c0_76] : memref<8x10x32xf32, #tpu.memory_space<vmem>>, vector<1x10x32xf32>
    %257 = vector.shape_cast %256 : vector<1x10x32xf32> to vector<10x32xf32>
    %258 = vector.shape_cast %255 : vector<10x32xf32> to vector<1x10x32xf32>
    tpu.vector_store %arg12[%c2_74, %c0_75, %c0_76], %258 {strides = array<i32>} : memref<8x10x32xf32, #tpu.memory_space<vmem>>, vector<1x10x32xf32>,
    %c2_77 = arith.constant 2 : index
    %c0_78 = arith.constant 0 : index
    %c0_79 = arith.constant 0 : index
    %259 = vector.load %arg4[%c2_77, %c0_78, %c0_79] : memref<7x10x10xf32, #tpu.memory_space<vmem>>, vector<1x10x10xf32>
    %260 = vector.shape_cast %259 : vector<1x10x10xf32> to vector<10x10xf32>
    %261 = vector.extract_strided_slice %260 {offsets = [0, 0], sizes = [10, 1], strides = [1, 1]} : vector<10x10xf32> to vector<10x1xf32>
    %262 = vector.extract_strided_slice %255 {offsets = [0, 0], sizes = [1, 32], strides = [1, 1]} : vector<10x32xf32> to vector<1x32xf32>
    %263 = vector.broadcast %261 : vector<10x1xf32> to vector<10x32xf32>
    %264 = vector.broadcast %262 : vector<1x32xf32> to vector<10x32xf32>
    %265 = arith.mulf %263, %264 : vector<10x32xf32>
    %266 = vector.extract_strided_slice %260 {offsets = [0, 1], sizes = [10, 1], strides = [1, 1]} : vector<10x10xf32> to vector<10x1xf32>
    %267 = vector.extract_strided_slice %255 {offsets = [1, 0], sizes = [1, 32], strides = [1, 1]} : vector<10x32xf32> to vector<1x32xf32>
    %268 = vector.broadcast %266 : vector<10x1xf32> to vector<10x32xf32>
    %269 = vector.broadcast %267 : vector<1x32xf32> to vector<10x32xf32>
    %270 = arith.mulf %268, %269 : vector<10x32xf32>
    %271 = arith.addf %265, %270 : vector<10x32xf32>
    %272 = vector.extract_strided_slice %260 {offsets = [0, 2], sizes = [10, 1], strides = [1, 1]} : vector<10x10xf32> to vector<10x1xf32>
    %273 = vector.extract_strided_slice %255 {offsets = [2, 0], sizes = [1, 32], strides = [1, 1]} : vector<10x32xf32> to vector<1x32xf32>
    %274 = vector.broadcast %272 : vector<10x1xf32> to vector<10x32xf32>
    %275 = vector.broadcast %273 : vector<1x32xf32> to vector<10x32xf32>
    %276 = arith.mulf %274, %275 : vector<10x32xf32>
    %277 = arith.addf %271, %276 : vector<10x32xf32>
    %278 = vector.extract_strided_slice %260 {offsets = [0, 3], sizes = [10, 1], strides = [1, 1]} : vector<10x10xf32> to vector<10x1xf32>
    %279 = vector.extract_strided_slice %255 {offsets = [3, 0], sizes = [1, 32], strides = [1, 1]} : vector<10x32xf32> to vector<1x32xf32>
    %280 = vector.broadcast %278 : vector<10x1xf32> to vector<10x32xf32>
    %281 = vector.broadcast %279 : vector<1x32xf32> to vector<10x32xf32>
    %282 = arith.mulf %280, %281 : vector<10x32xf32>
    %283 = arith.addf %277, %282 : vector<10x32xf32>
    %284 = vector.extract_strided_slice %260 {offsets = [0, 4], sizes = [10, 1], strides = [1, 1]} : vector<10x10xf32> to vector<10x1xf32>
    %285 = vector.extract_strided_slice %255 {offsets = [4, 0], sizes = [1, 32], strides = [1, 1]} : vector<10x32xf32> to vector<1x32xf32>
    %286 = vector.broadcast %284 : vector<10x1xf32> to vector<10x32xf32>
    %287 = vector.broadcast %285 : vector<1x32xf32> to vector<10x32xf32>
    %288 = arith.mulf %286, %287 : vector<10x32xf32>
    %289 = arith.addf %283, %288 : vector<10x32xf32>
    %290 = vector.extract_strided_slice %260 {offsets = [0, 5], sizes = [10, 1], strides = [1, 1]} : vector<10x10xf32> to vector<10x1xf32>
    %291 = vector.extract_strided_slice %255 {offsets = [5, 0], sizes = [1, 32], strides = [1, 1]} : vector<10x32xf32> to vector<1x32xf32>
    %292 = vector.broadcast %290 : vector<10x1xf32> to vector<10x32xf32>
    %293 = vector.broadcast %291 : vector<1x32xf32> to vector<10x32xf32>
    %294 = arith.mulf %292, %293 : vector<10x32xf32>
    %295 = arith.addf %289, %294 : vector<10x32xf32>
    %296 = vector.extract_strided_slice %260 {offsets = [0, 6], sizes = [10, 1], strides = [1, 1]} : vector<10x10xf32> to vector<10x1xf32>
    %297 = vector.extract_strided_slice %255 {offsets = [6, 0], sizes = [1, 32], strides = [1, 1]} : vector<10x32xf32> to vector<1x32xf32>
    %298 = vector.broadcast %296 : vector<10x1xf32> to vector<10x32xf32>
    %299 = vector.broadcast %297 : vector<1x32xf32> to vector<10x32xf32>
    %300 = arith.mulf %298, %299 : vector<10x32xf32>
    %301 = arith.addf %295, %300 : vector<10x32xf32>
    %302 = vector.extract_strided_slice %260 {offsets = [0, 7], sizes = [10, 1], strides = [1, 1]} : vector<10x10xf32> to vector<10x1xf32>
    %303 = vector.extract_strided_slice %255 {offsets = [7, 0], sizes = [1, 32], strides = [1, 1]} : vector<10x32xf32> to vector<1x32xf32>
    %304 = vector.broadcast %302 : vector<10x1xf32> to vector<10x32xf32>
    %305 = vector.broadcast %303 : vector<1x32xf32> to vector<10x32xf32>
    %306 = arith.mulf %304, %305 : vector<10x32xf32>
    %307 = arith.addf %301, %306 : vector<10x32xf32>
    %308 = vector.extract_strided_slice %260 {offsets = [0, 8], sizes = [10, 1], strides = [1, 1]} : vector<10x10xf32> to vector<10x1xf32>
    %309 = vector.extract_strided_slice %255 {offsets = [8, 0], sizes = [1, 32], strides = [1, 1]} : vector<10x32xf32> to vector<1x32xf32>
    %310 = vector.broadcast %308 : vector<10x1xf32> to vector<10x32xf32>
    %311 = vector.broadcast %309 : vector<1x32xf32> to vector<10x32xf32>
    %312 = arith.mulf %310, %311 : vector<10x32xf32>
    %313 = arith.addf %307, %312 : vector<10x32xf32>
    %314 = vector.extract_strided_slice %260 {offsets = [0, 9], sizes = [10, 1], strides = [1, 1]} : vector<10x10xf32> to vector<10x1xf32>
    %315 = vector.extract_strided_slice %255 {offsets = [9, 0], sizes = [1, 32], strides = [1, 1]} : vector<10x32xf32> to vector<1x32xf32>
    %316 = vector.broadcast %314 : vector<10x1xf32> to vector<10x32xf32>
    %317 = vector.broadcast %315 : vector<1x32xf32> to vector<10x32xf32>
    %318 = arith.mulf %316, %317 : vector<10x32xf32>
    %319 = arith.addf %313, %318 : vector<10x32xf32>
    %c3 = arith.constant 3 : index
    %c0_80 = arith.constant 0 : index
    %c0_81 = arith.constant 0 : index
    %320 = vector.load %arg5[%c3, %c0_80, %c0_81] : memref<8x10x1xf32, #tpu.memory_space<vmem>>, vector<1x10x1xf32>
    %321 = vector.shape_cast %320 : vector<1x10x1xf32> to vector<10x1xf32>
    %322 = vector.broadcast %321 : vector<10x1xf32> to vector<10x32xf32>
    %323 = arith.addf %319, %322 : vector<10x32xf32>
    %c3_82 = arith.constant 3 : index
    %c0_83 = arith.constant 0 : index
    %c0_84 = arith.constant 0 : index
    %324 = vector.load %arg13[%c3_82, %c0_83, %c0_84] : memref<8x10x32xf32, #tpu.memory_space<vmem>>, vector<1x10x32xf32>
    %325 = vector.shape_cast %324 : vector<1x10x32xf32> to vector<10x32xf32>
    %326 = vector.shape_cast %323 : vector<10x32xf32> to vector<1x10x32xf32>
    tpu.vector_store %arg13[%c3_82, %c0_83, %c0_84], %326 {strides = array<i32>} : memref<8x10x32xf32, #tpu.memory_space<vmem>>, vector<1x10x32xf32>,
    %c3_85 = arith.constant 3 : index
    %c0_86 = arith.constant 0 : index
    %c0_87 = arith.constant 0 : index
    %327 = vector.load %arg6[%c3_85, %c0_86, %c0_87] : memref<8x10x1xf32, #tpu.memory_space<vmem>>, vector<1x10x1xf32>
    %328 = vector.shape_cast %327 : vector<1x10x1xf32> to vector<10x1xf32>
    %c3_88 = arith.constant 3 : index
    %c0_89 = arith.constant 0 : index
    %c0_90 = arith.constant 0 : index
    %329 = vector.load %arg7[%c3_88, %c0_89, %c0_90] : memref<8x10x1xf32, #tpu.memory_space<vmem>>, vector<1x10x1xf32>
    %330 = vector.shape_cast %329 : vector<1x10x1xf32> to vector<10x1xf32>
    %cst_91 = arith.constant dense<0.000000e+00> : vector<10xf32>
    %331 = vector.multi_reduction <add>, %319, %cst_91 [1] : vector<10x32xf32> to vector<10xf32>
    %332 = vector.shape_cast %331 : vector<10xf32> to vector<10x1xf32>
    %cst_92 = arith.constant 3.125000e-02 : f32
    %333 = vector.broadcast %cst_92 : f32 to vector<10x1xf32>
    %334 = arith.mulf %332, %333 : vector<10x1xf32>
    %335 = arith.mulf %319, %319 : vector<10x32xf32>
    %cst_93 = arith.constant dense<0.000000e+00> : vector<10xf32>
    %336 = vector.multi_reduction <add>, %335, %cst_93 [1] : vector<10x32xf32> to vector<10xf32>
    %337 = vector.shape_cast %336 : vector<10xf32> to vector<10x1xf32>
    %cst_94 = arith.constant 3.125000e-02 : f32
    %338 = vector.broadcast %cst_94 : f32 to vector<10x1xf32>
    %339 = arith.mulf %337, %338 : vector<10x1xf32>
    %340 = arith.mulf %334, %334 : vector<10x1xf32>
    %341 = arith.subf %339, %340 : vector<10x1xf32>
    %cst_95 = arith.constant 9.99999974E-6 : f32
    %342 = vector.broadcast %cst_95 : f32 to vector<10x1xf32>
    %343 = arith.addf %341, %342 : vector<10x1xf32>
    %344 = math.rsqrt %343 : vector<10x1xf32>
    %345 = vector.broadcast %334 : vector<10x1xf32> to vector<10x32xf32>
    %346 = arith.subf %319, %345 : vector<10x32xf32>
    %347 = arith.mulf %344, %328 : vector<10x1xf32>
    %348 = vector.broadcast %347 : vector<10x1xf32> to vector<10x32xf32>
    %349 = arith.mulf %346, %348 : vector<10x32xf32>
    %350 = vector.broadcast %330 : vector<10x1xf32> to vector<10x32xf32>
    %351 = arith.addf %349, %350 : vector<10x32xf32>
    %352 = math.tanh %351 : vector<10x32xf32>
    %c3_96 = arith.constant 3 : index
    %c0_97 = arith.constant 0 : index
    %c0_98 = arith.constant 0 : index
    %353 = vector.load %arg12[%c3_96, %c0_97, %c0_98] : memref<8x10x32xf32, #tpu.memory_space<vmem>>, vector<1x10x32xf32>
    %354 = vector.shape_cast %353 : vector<1x10x32xf32> to vector<10x32xf32>
    %355 = vector.shape_cast %352 : vector<10x32xf32> to vector<1x10x32xf32>
    tpu.vector_store %arg12[%c3_96, %c0_97, %c0_98], %355 {strides = array<i32>} : memref<8x10x32xf32, #tpu.memory_space<vmem>>, vector<1x10x32xf32>,
    %c3_99 = arith.constant 3 : index
    %c0_100 = arith.constant 0 : index
    %c0_101 = arith.constant 0 : index
    %356 = vector.load %arg4[%c3_99, %c0_100, %c0_101] : memref<7x10x10xf32, #tpu.memory_space<vmem>>, vector<1x10x10xf32>
    %357 = vector.shape_cast %356 : vector<1x10x10xf32> to vector<10x10xf32>
    %358 = vector.extract_strided_slice %357 {offsets = [0, 0], sizes = [10, 1], strides = [1, 1]} : vector<10x10xf32> to vector<10x1xf32>
    %359 = vector.extract_strided_slice %352 {offsets = [0, 0], sizes = [1, 32], strides = [1, 1]} : vector<10x32xf32> to vector<1x32xf32>
    %360 = vector.broadcast %358 : vector<10x1xf32> to vector<10x32xf32>
    %361 = vector.broadcast %359 : vector<1x32xf32> to vector<10x32xf32>
    %362 = arith.mulf %360, %361 : vector<10x32xf32>
    %363 = vector.extract_strided_slice %357 {offsets = [0, 1], sizes = [10, 1], strides = [1, 1]} : vector<10x10xf32> to vector<10x1xf32>
    %364 = vector.extract_strided_slice %352 {offsets = [1, 0], sizes = [1, 32], strides = [1, 1]} : vector<10x32xf32> to vector<1x32xf32>
    %365 = vector.broadcast %363 : vector<10x1xf32> to vector<10x32xf32>
    %366 = vector.broadcast %364 : vector<1x32xf32> to vector<10x32xf32>
    %367 = arith.mulf %365, %366 : vector<10x32xf32>
    %368 = arith.addf %362, %367 : vector<10x32xf32>
    %369 = vector.extract_strided_slice %357 {offsets = [0, 2], sizes = [10, 1], strides = [1, 1]} : vector<10x10xf32> to vector<10x1xf32>
    %370 = vector.extract_strided_slice %352 {offsets = [2, 0], sizes = [1, 32], strides = [1, 1]} : vector<10x32xf32> to vector<1x32xf32>
    %371 = vector.broadcast %369 : vector<10x1xf32> to vector<10x32xf32>
    %372 = vector.broadcast %370 : vector<1x32xf32> to vector<10x32xf32>
    %373 = arith.mulf %371, %372 : vector<10x32xf32>
    %374 = arith.addf %368, %373 : vector<10x32xf32>
    %375 = vector.extract_strided_slice %357 {offsets = [0, 3], sizes = [10, 1], strides = [1, 1]} : vector<10x10xf32> to vector<10x1xf32>
    %376 = vector.extract_strided_slice %352 {offsets = [3, 0], sizes = [1, 32], strides = [1, 1]} : vector<10x32xf32> to vector<1x32xf32>
    %377 = vector.broadcast %375 : vector<10x1xf32> to vector<10x32xf32>
    %378 = vector.broadcast %376 : vector<1x32xf32> to vector<10x32xf32>
    %379 = arith.mulf %377, %378 : vector<10x32xf32>
    %380 = arith.addf %374, %379 : vector<10x32xf32>
    %381 = vector.extract_strided_slice %357 {offsets = [0, 4], sizes = [10, 1], strides = [1, 1]} : vector<10x10xf32> to vector<10x1xf32>
    %382 = vector.extract_strided_slice %352 {offsets = [4, 0], sizes = [1, 32], strides = [1, 1]} : vector<10x32xf32> to vector<1x32xf32>
    %383 = vector.broadcast %381 : vector<10x1xf32> to vector<10x32xf32>
    %384 = vector.broadcast %382 : vector<1x32xf32> to vector<10x32xf32>
    %385 = arith.mulf %383, %384 : vector<10x32xf32>
    %386 = arith.addf %380, %385 : vector<10x32xf32>
    %387 = vector.extract_strided_slice %357 {offsets = [0, 5], sizes = [10, 1], strides = [1, 1]} : vector<10x10xf32> to vector<10x1xf32>
    %388 = vector.extract_strided_slice %352 {offsets = [5, 0], sizes = [1, 32], strides = [1, 1]} : vector<10x32xf32> to vector<1x32xf32>
    %389 = vector.broadcast %387 : vector<10x1xf32> to vector<10x32xf32>
    %390 = vector.broadcast %388 : vector<1x32xf32> to vector<10x32xf32>
    %391 = arith.mulf %389, %390 : vector<10x32xf32>
    %392 = arith.addf %386, %391 : vector<10x32xf32>
    %393 = vector.extract_strided_slice %357 {offsets = [0, 6], sizes = [10, 1], strides = [1, 1]} : vector<10x10xf32> to vector<10x1xf32>
    %394 = vector.extract_strided_slice %352 {offsets = [6, 0], sizes = [1, 32], strides = [1, 1]} : vector<10x32xf32> to vector<1x32xf32>
    %395 = vector.broadcast %393 : vector<10x1xf32> to vector<10x32xf32>
    %396 = vector.broadcast %394 : vector<1x32xf32> to vector<10x32xf32>
    %397 = arith.mulf %395, %396 : vector<10x32xf32>
    %398 = arith.addf %392, %397 : vector<10x32xf32>
    %399 = vector.extract_strided_slice %357 {offsets = [0, 7], sizes = [10, 1], strides = [1, 1]} : vector<10x10xf32> to vector<10x1xf32>
    %400 = vector.extract_strided_slice %352 {offsets = [7, 0], sizes = [1, 32], strides = [1, 1]} : vector<10x32xf32> to vector<1x32xf32>
    %401 = vector.broadcast %399 : vector<10x1xf32> to vector<10x32xf32>
    %402 = vector.broadcast %400 : vector<1x32xf32> to vector<10x32xf32>
    %403 = arith.mulf %401, %402 : vector<10x32xf32>
    %404 = arith.addf %398, %403 : vector<10x32xf32>
    %405 = vector.extract_strided_slice %357 {offsets = [0, 8], sizes = [10, 1], strides = [1, 1]} : vector<10x10xf32> to vector<10x1xf32>
    %406 = vector.extract_strided_slice %352 {offsets = [8, 0], sizes = [1, 32], strides = [1, 1]} : vector<10x32xf32> to vector<1x32xf32>
    %407 = vector.broadcast %405 : vector<10x1xf32> to vector<10x32xf32>
    %408 = vector.broadcast %406 : vector<1x32xf32> to vector<10x32xf32>
    %409 = arith.mulf %407, %408 : vector<10x32xf32>
    %410 = arith.addf %404, %409 : vector<10x32xf32>
    %411 = vector.extract_strided_slice %357 {offsets = [0, 9], sizes = [10, 1], strides = [1, 1]} : vector<10x10xf32> to vector<10x1xf32>
    %412 = vector.extract_strided_slice %352 {offsets = [9, 0], sizes = [1, 32], strides = [1, 1]} : vector<10x32xf32> to vector<1x32xf32>
    %413 = vector.broadcast %411 : vector<10x1xf32> to vector<10x32xf32>
    %414 = vector.broadcast %412 : vector<1x32xf32> to vector<10x32xf32>
    %415 = arith.mulf %413, %414 : vector<10x32xf32>
    %416 = arith.addf %410, %415 : vector<10x32xf32>
    %c4 = arith.constant 4 : index
    %c0_102 = arith.constant 0 : index
    %c0_103 = arith.constant 0 : index
    %417 = vector.load %arg5[%c4, %c0_102, %c0_103] : memref<8x10x1xf32, #tpu.memory_space<vmem>>, vector<1x10x1xf32>
    %418 = vector.shape_cast %417 : vector<1x10x1xf32> to vector<10x1xf32>
    %419 = vector.broadcast %418 : vector<10x1xf32> to vector<10x32xf32>
    %420 = arith.addf %416, %419 : vector<10x32xf32>
    %c4_104 = arith.constant 4 : index
    %c0_105 = arith.constant 0 : index
    %c0_106 = arith.constant 0 : index
    %421 = vector.load %arg13[%c4_104, %c0_105, %c0_106] : memref<8x10x32xf32, #tpu.memory_space<vmem>>, vector<1x10x32xf32>
    %422 = vector.shape_cast %421 : vector<1x10x32xf32> to vector<10x32xf32>
    %423 = vector.shape_cast %420 : vector<10x32xf32> to vector<1x10x32xf32>
    tpu.vector_store %arg13[%c4_104, %c0_105, %c0_106], %423 {strides = array<i32>} : memref<8x10x32xf32, #tpu.memory_space<vmem>>, vector<1x10x32xf32>,
    %c4_107 = arith.constant 4 : index
    %c0_108 = arith.constant 0 : index
    %c0_109 = arith.constant 0 : index
    %424 = vector.load %arg6[%c4_107, %c0_108, %c0_109] : memref<8x10x1xf32, #tpu.memory_space<vmem>>, vector<1x10x1xf32>
    %425 = vector.shape_cast %424 : vector<1x10x1xf32> to vector<10x1xf32>
    %c4_110 = arith.constant 4 : index
    %c0_111 = arith.constant 0 : index
    %c0_112 = arith.constant 0 : index
    %426 = vector.load %arg7[%c4_110, %c0_111, %c0_112] : memref<8x10x1xf32, #tpu.memory_space<vmem>>, vector<1x10x1xf32>
    %427 = vector.shape_cast %426 : vector<1x10x1xf32> to vector<10x1xf32>
    %cst_113 = arith.constant dense<0.000000e+00> : vector<10xf32>
    %428 = vector.multi_reduction <add>, %416, %cst_113 [1] : vector<10x32xf32> to vector<10xf32>
    %429 = vector.shape_cast %428 : vector<10xf32> to vector<10x1xf32>
    %cst_114 = arith.constant 3.125000e-02 : f32
    %430 = vector.broadcast %cst_114 : f32 to vector<10x1xf32>
    %431 = arith.mulf %429, %430 : vector<10x1xf32>
    %432 = arith.mulf %416, %416 : vector<10x32xf32>
    %cst_115 = arith.constant dense<0.000000e+00> : vector<10xf32>
    %433 = vector.multi_reduction <add>, %432, %cst_115 [1] : vector<10x32xf32> to vector<10xf32>
    %434 = vector.shape_cast %433 : vector<10xf32> to vector<10x1xf32>
    %cst_116 = arith.constant 3.125000e-02 : f32
    %435 = vector.broadcast %cst_116 : f32 to vector<10x1xf32>
    %436 = arith.mulf %434, %435 : vector<10x1xf32>
    %437 = arith.mulf %431, %431 : vector<10x1xf32>
    %438 = arith.subf %436, %437 : vector<10x1xf32>
    %cst_117 = arith.constant 9.99999974E-6 : f32
    %439 = vector.broadcast %cst_117 : f32 to vector<10x1xf32>
    %440 = arith.addf %438, %439 : vector<10x1xf32>
    %441 = math.rsqrt %440 : vector<10x1xf32>
    %442 = vector.broadcast %431 : vector<10x1xf32> to vector<10x32xf32>
    %443 = arith.subf %416, %442 : vector<10x32xf32>
    %444 = arith.mulf %441, %425 : vector<10x1xf32>
    %445 = vector.broadcast %444 : vector<10x1xf32> to vector<10x32xf32>
    %446 = arith.mulf %443, %445 : vector<10x32xf32>
    %447 = vector.broadcast %427 : vector<10x1xf32> to vector<10x32xf32>
    %448 = arith.addf %446, %447 : vector<10x32xf32>
    %449 = math.tanh %448 : vector<10x32xf32>
    %c4_118 = arith.constant 4 : index
    %c0_119 = arith.constant 0 : index
    %c0_120 = arith.constant 0 : index
    %450 = vector.load %arg12[%c4_118, %c0_119, %c0_120] : memref<8x10x32xf32, #tpu.memory_space<vmem>>, vector<1x10x32xf32>
    %451 = vector.shape_cast %450 : vector<1x10x32xf32> to vector<10x32xf32>
    %452 = vector.shape_cast %449 : vector<10x32xf32> to vector<1x10x32xf32>
    tpu.vector_store %arg12[%c4_118, %c0_119, %c0_120], %452 {strides = array<i32>} : memref<8x10x32xf32, #tpu.memory_space<vmem>>, vector<1x10x32xf32>,
    %c4_121 = arith.constant 4 : index
    %c0_122 = arith.constant 0 : index
    %c0_123 = arith.constant 0 : index
    %453 = vector.load %arg4[%c4_121, %c0_122, %c0_123] : memref<7x10x10xf32, #tpu.memory_space<vmem>>, vector<1x10x10xf32>
    %454 = vector.shape_cast %453 : vector<1x10x10xf32> to vector<10x10xf32>
    %455 = vector.extract_strided_slice %454 {offsets = [0, 0], sizes = [10, 1], strides = [1, 1]} : vector<10x10xf32> to vector<10x1xf32>
    %456 = vector.extract_strided_slice %449 {offsets = [0, 0], sizes = [1, 32], strides = [1, 1]} : vector<10x32xf32> to vector<1x32xf32>
    %457 = vector.broadcast %455 : vector<10x1xf32> to vector<10x32xf32>
    %458 = vector.broadcast %456 : vector<1x32xf32> to vector<10x32xf32>
    %459 = arith.mulf %457, %458 : vector<10x32xf32>
    %460 = vector.extract_strided_slice %454 {offsets = [0, 1], sizes = [10, 1], strides = [1, 1]} : vector<10x10xf32> to vector<10x1xf32>
    %461 = vector.extract_strided_slice %449 {offsets = [1, 0], sizes = [1, 32], strides = [1, 1]} : vector<10x32xf32> to vector<1x32xf32>
    %462 = vector.broadcast %460 : vector<10x1xf32> to vector<10x32xf32>
    %463 = vector.broadcast %461 : vector<1x32xf32> to vector<10x32xf32>
    %464 = arith.mulf %462, %463 : vector<10x32xf32>
    %465 = arith.addf %459, %464 : vector<10x32xf32>
    %466 = vector.extract_strided_slice %454 {offsets = [0, 2], sizes = [10, 1], strides = [1, 1]} : vector<10x10xf32> to vector<10x1xf32>
    %467 = vector.extract_strided_slice %449 {offsets = [2, 0], sizes = [1, 32], strides = [1, 1]} : vector<10x32xf32> to vector<1x32xf32>
    %468 = vector.broadcast %466 : vector<10x1xf32> to vector<10x32xf32>
    %469 = vector.broadcast %467 : vector<1x32xf32> to vector<10x32xf32>
    %470 = arith.mulf %468, %469 : vector<10x32xf32>
    %471 = arith.addf %465, %470 : vector<10x32xf32>
    %472 = vector.extract_strided_slice %454 {offsets = [0, 3], sizes = [10, 1], strides = [1, 1]} : vector<10x10xf32> to vector<10x1xf32>
    %473 = vector.extract_strided_slice %449 {offsets = [3, 0], sizes = [1, 32], strides = [1, 1]} : vector<10x32xf32> to vector<1x32xf32>
    %474 = vector.broadcast %472 : vector<10x1xf32> to vector<10x32xf32>
    %475 = vector.broadcast %473 : vector<1x32xf32> to vector<10x32xf32>
    %476 = arith.mulf %474, %475 : vector<10x32xf32>
    %477 = arith.addf %471, %476 : vector<10x32xf32>
    %478 = vector.extract_strided_slice %454 {offsets = [0, 4], sizes = [10, 1], strides = [1, 1]} : vector<10x10xf32> to vector<10x1xf32>
    %479 = vector.extract_strided_slice %449 {offsets = [4, 0], sizes = [1, 32], strides = [1, 1]} : vector<10x32xf32> to vector<1x32xf32>
    %480 = vector.broadcast %478 : vector<10x1xf32> to vector<10x32xf32>
    %481 = vector.broadcast %479 : vector<1x32xf32> to vector<10x32xf32>
    %482 = arith.mulf %480, %481 : vector<10x32xf32>
    %483 = arith.addf %477, %482 : vector<10x32xf32>
    %484 = vector.extract_strided_slice %454 {offsets = [0, 5], sizes = [10, 1], strides = [1, 1]} : vector<10x10xf32> to vector<10x1xf32>
    %485 = vector.extract_strided_slice %449 {offsets = [5, 0], sizes = [1, 32], strides = [1, 1]} : vector<10x32xf32> to vector<1x32xf32>
    %486 = vector.broadcast %484 : vector<10x1xf32> to vector<10x32xf32>
    %487 = vector.broadcast %485 : vector<1x32xf32> to vector<10x32xf32>
    %488 = arith.mulf %486, %487 : vector<10x32xf32>
    %489 = arith.addf %483, %488 : vector<10x32xf32>
    %490 = vector.extract_strided_slice %454 {offsets = [0, 6], sizes = [10, 1], strides = [1, 1]} : vector<10x10xf32> to vector<10x1xf32>
    %491 = vector.extract_strided_slice %449 {offsets = [6, 0], sizes = [1, 32], strides = [1, 1]} : vector<10x32xf32> to vector<1x32xf32>
    %492 = vector.broadcast %490 : vector<10x1xf32> to vector<10x32xf32>
    %493 = vector.broadcast %491 : vector<1x32xf32> to vector<10x32xf32>
    %494 = arith.mulf %492, %493 : vector<10x32xf32>
    %495 = arith.addf %489, %494 : vector<10x32xf32>
    %496 = vector.extract_strided_slice %454 {offsets = [0, 7], sizes = [10, 1], strides = [1, 1]} : vector<10x10xf32> to vector<10x1xf32>
    %497 = vector.extract_strided_slice %449 {offsets = [7, 0], sizes = [1, 32], strides = [1, 1]} : vector<10x32xf32> to vector<1x32xf32>
    %498 = vector.broadcast %496 : vector<10x1xf32> to vector<10x32xf32>
    %499 = vector.broadcast %497 : vector<1x32xf32> to vector<10x32xf32>
    %500 = arith.mulf %498, %499 : vector<10x32xf32>
    %501 = arith.addf %495, %500 : vector<10x32xf32>
    %502 = vector.extract_strided_slice %454 {offsets = [0, 8], sizes = [10, 1], strides = [1, 1]} : vector<10x10xf32> to vector<10x1xf32>
    %503 = vector.extract_strided_slice %449 {offsets = [8, 0], sizes = [1, 32], strides = [1, 1]} : vector<10x32xf32> to vector<1x32xf32>
    %504 = vector.broadcast %502 : vector<10x1xf32> to vector<10x32xf32>
    %505 = vector.broadcast %503 : vector<1x32xf32> to vector<10x32xf32>
    %506 = arith.mulf %504, %505 : vector<10x32xf32>
    %507 = arith.addf %501, %506 : vector<10x32xf32>
    %508 = vector.extract_strided_slice %454 {offsets = [0, 9], sizes = [10, 1], strides = [1, 1]} : vector<10x10xf32> to vector<10x1xf32>
    %509 = vector.extract_strided_slice %449 {offsets = [9, 0], sizes = [1, 32], strides = [1, 1]} : vector<10x32xf32> to vector<1x32xf32>
    %510 = vector.broadcast %508 : vector<10x1xf32> to vector<10x32xf32>
    %511 = vector.broadcast %509 : vector<1x32xf32> to vector<10x32xf32>
    %512 = arith.mulf %510, %511 : vector<10x32xf32>
    %513 = arith.addf %507, %512 : vector<10x32xf32>
    %c5 = arith.constant 5 : index
    %c0_124 = arith.constant 0 : index
    %c0_125 = arith.constant 0 : index
    %514 = vector.load %arg5[%c5, %c0_124, %c0_125] : memref<8x10x1xf32, #tpu.memory_space<vmem>>, vector<1x10x1xf32>
    %515 = vector.shape_cast %514 : vector<1x10x1xf32> to vector<10x1xf32>
    %516 = vector.broadcast %515 : vector<10x1xf32> to vector<10x32xf32>
    %517 = arith.addf %513, %516 : vector<10x32xf32>
    %c5_126 = arith.constant 5 : index
    %c0_127 = arith.constant 0 : index
    %c0_128 = arith.constant 0 : index
    %518 = vector.load %arg13[%c5_126, %c0_127, %c0_128] : memref<8x10x32xf32, #tpu.memory_space<vmem>>, vector<1x10x32xf32>
    %519 = vector.shape_cast %518 : vector<1x10x32xf32> to vector<10x32xf32>
    %520 = vector.shape_cast %517 : vector<10x32xf32> to vector<1x10x32xf32>
    tpu.vector_store %arg13[%c5_126, %c0_127, %c0_128], %520 {strides = array<i32>} : memref<8x10x32xf32, #tpu.memory_space<vmem>>, vector<1x10x32xf32>,
    %c5_129 = arith.constant 5 : index
    %c0_130 = arith.constant 0 : index
    %c0_131 = arith.constant 0 : index
    %521 = vector.load %arg6[%c5_129, %c0_130, %c0_131] : memref<8x10x1xf32, #tpu.memory_space<vmem>>, vector<1x10x1xf32>
    %522 = vector.shape_cast %521 : vector<1x10x1xf32> to vector<10x1xf32>
    %c5_132 = arith.constant 5 : index
    %c0_133 = arith.constant 0 : index
    %c0_134 = arith.constant 0 : index
    %523 = vector.load %arg7[%c5_132, %c0_133, %c0_134] : memref<8x10x1xf32, #tpu.memory_space<vmem>>, vector<1x10x1xf32>
    %524 = vector.shape_cast %523 : vector<1x10x1xf32> to vector<10x1xf32>
    %cst_135 = arith.constant dense<0.000000e+00> : vector<10xf32>
    %525 = vector.multi_reduction <add>, %513, %cst_135 [1] : vector<10x32xf32> to vector<10xf32>
    %526 = vector.shape_cast %525 : vector<10xf32> to vector<10x1xf32>
    %cst_136 = arith.constant 3.125000e-02 : f32
    %527 = vector.broadcast %cst_136 : f32 to vector<10x1xf32>
    %528 = arith.mulf %526, %527 : vector<10x1xf32>
    %529 = arith.mulf %513, %513 : vector<10x32xf32>
    %cst_137 = arith.constant dense<0.000000e+00> : vector<10xf32>
    %530 = vector.multi_reduction <add>, %529, %cst_137 [1] : vector<10x32xf32> to vector<10xf32>
    %531 = vector.shape_cast %530 : vector<10xf32> to vector<10x1xf32>
    %cst_138 = arith.constant 3.125000e-02 : f32
    %532 = vector.broadcast %cst_138 : f32 to vector<10x1xf32>
    %533 = arith.mulf %531, %532 : vector<10x1xf32>
    %534 = arith.mulf %528, %528 : vector<10x1xf32>
    %535 = arith.subf %533, %534 : vector<10x1xf32>
    %cst_139 = arith.constant 9.99999974E-6 : f32
    %536 = vector.broadcast %cst_139 : f32 to vector<10x1xf32>
    %537 = arith.addf %535, %536 : vector<10x1xf32>
    %538 = math.rsqrt %537 : vector<10x1xf32>
    %539 = vector.broadcast %528 : vector<10x1xf32> to vector<10x32xf32>
    %540 = arith.subf %513, %539 : vector<10x32xf32>
    %541 = arith.mulf %538, %522 : vector<10x1xf32>
    %542 = vector.broadcast %541 : vector<10x1xf32> to vector<10x32xf32>
    %543 = arith.mulf %540, %542 : vector<10x32xf32>
    %544 = vector.broadcast %524 : vector<10x1xf32> to vector<10x32xf32>
    %545 = arith.addf %543, %544 : vector<10x32xf32>
    %546 = math.tanh %545 : vector<10x32xf32>
    %c5_140 = arith.constant 5 : index
    %c0_141 = arith.constant 0 : index
    %c0_142 = arith.constant 0 : index
    %547 = vector.load %arg12[%c5_140, %c0_141, %c0_142] : memref<8x10x32xf32, #tpu.memory_space<vmem>>, vector<1x10x32xf32>
    %548 = vector.shape_cast %547 : vector<1x10x32xf32> to vector<10x32xf32>
    %549 = vector.shape_cast %546 : vector<10x32xf32> to vector<1x10x32xf32>
    tpu.vector_store %arg12[%c5_140, %c0_141, %c0_142], %549 {strides = array<i32>} : memref<8x10x32xf32, #tpu.memory_space<vmem>>, vector<1x10x32xf32>,
    %c5_143 = arith.constant 5 : index
    %c0_144 = arith.constant 0 : index
    %c0_145 = arith.constant 0 : index
    %550 = vector.load %arg4[%c5_143, %c0_144, %c0_145] : memref<7x10x10xf32, #tpu.memory_space<vmem>>, vector<1x10x10xf32>
    %551 = vector.shape_cast %550 : vector<1x10x10xf32> to vector<10x10xf32>
    %552 = vector.extract_strided_slice %551 {offsets = [0, 0], sizes = [10, 1], strides = [1, 1]} : vector<10x10xf32> to vector<10x1xf32>
    %553 = vector.extract_strided_slice %546 {offsets = [0, 0], sizes = [1, 32], strides = [1, 1]} : vector<10x32xf32> to vector<1x32xf32>
    %554 = vector.broadcast %552 : vector<10x1xf32> to vector<10x32xf32>
    %555 = vector.broadcast %553 : vector<1x32xf32> to vector<10x32xf32>
    %556 = arith.mulf %554, %555 : vector<10x32xf32>
    %557 = vector.extract_strided_slice %551 {offsets = [0, 1], sizes = [10, 1], strides = [1, 1]} : vector<10x10xf32> to vector<10x1xf32>
    %558 = vector.extract_strided_slice %546 {offsets = [1, 0], sizes = [1, 32], strides = [1, 1]} : vector<10x32xf32> to vector<1x32xf32>
    %559 = vector.broadcast %557 : vector<10x1xf32> to vector<10x32xf32>
    %560 = vector.broadcast %558 : vector<1x32xf32> to vector<10x32xf32>
    %561 = arith.mulf %559, %560 : vector<10x32xf32>
    %562 = arith.addf %556, %561 : vector<10x32xf32>
    %563 = vector.extract_strided_slice %551 {offsets = [0, 2], sizes = [10, 1], strides = [1, 1]} : vector<10x10xf32> to vector<10x1xf32>
    %564 = vector.extract_strided_slice %546 {offsets = [2, 0], sizes = [1, 32], strides = [1, 1]} : vector<10x32xf32> to vector<1x32xf32>
    %565 = vector.broadcast %563 : vector<10x1xf32> to vector<10x32xf32>
    %566 = vector.broadcast %564 : vector<1x32xf32> to vector<10x32xf32>
    %567 = arith.mulf %565, %566 : vector<10x32xf32>
    %568 = arith.addf %562, %567 : vector<10x32xf32>
    %569 = vector.extract_strided_slice %551 {offsets = [0, 3], sizes = [10, 1], strides = [1, 1]} : vector<10x10xf32> to vector<10x1xf32>
    %570 = vector.extract_strided_slice %546 {offsets = [3, 0], sizes = [1, 32], strides = [1, 1]} : vector<10x32xf32> to vector<1x32xf32>
    %571 = vector.broadcast %569 : vector<10x1xf32> to vector<10x32xf32>
    %572 = vector.broadcast %570 : vector<1x32xf32> to vector<10x32xf32>
    %573 = arith.mulf %571, %572 : vector<10x32xf32>
    %574 = arith.addf %568, %573 : vector<10x32xf32>
    %575 = vector.extract_strided_slice %551 {offsets = [0, 4], sizes = [10, 1], strides = [1, 1]} : vector<10x10xf32> to vector<10x1xf32>
    %576 = vector.extract_strided_slice %546 {offsets = [4, 0], sizes = [1, 32], strides = [1, 1]} : vector<10x32xf32> to vector<1x32xf32>
    %577 = vector.broadcast %575 : vector<10x1xf32> to vector<10x32xf32>
    %578 = vector.broadcast %576 : vector<1x32xf32> to vector<10x32xf32>
    %579 = arith.mulf %577, %578 : vector<10x32xf32>
    %580 = arith.addf %574, %579 : vector<10x32xf32>
    %581 = vector.extract_strided_slice %551 {offsets = [0, 5], sizes = [10, 1], strides = [1, 1]} : vector<10x10xf32> to vector<10x1xf32>
    %582 = vector.extract_strided_slice %546 {offsets = [5, 0], sizes = [1, 32], strides = [1, 1]} : vector<10x32xf32> to vector<1x32xf32>
    %583 = vector.broadcast %581 : vector<10x1xf32> to vector<10x32xf32>
    %584 = vector.broadcast %582 : vector<1x32xf32> to vector<10x32xf32>
    %585 = arith.mulf %583, %584 : vector<10x32xf32>
    %586 = arith.addf %580, %585 : vector<10x32xf32>
    %587 = vector.extract_strided_slice %551 {offsets = [0, 6], sizes = [10, 1], strides = [1, 1]} : vector<10x10xf32> to vector<10x1xf32>
    %588 = vector.extract_strided_slice %546 {offsets = [6, 0], sizes = [1, 32], strides = [1, 1]} : vector<10x32xf32> to vector<1x32xf32>
    %589 = vector.broadcast %587 : vector<10x1xf32> to vector<10x32xf32>
    %590 = vector.broadcast %588 : vector<1x32xf32> to vector<10x32xf32>
    %591 = arith.mulf %589, %590 : vector<10x32xf32>
    %592 = arith.addf %586, %591 : vector<10x32xf32>
    %593 = vector.extract_strided_slice %551 {offsets = [0, 7], sizes = [10, 1], strides = [1, 1]} : vector<10x10xf32> to vector<10x1xf32>
    %594 = vector.extract_strided_slice %546 {offsets = [7, 0], sizes = [1, 32], strides = [1, 1]} : vector<10x32xf32> to vector<1x32xf32>
    %595 = vector.broadcast %593 : vector<10x1xf32> to vector<10x32xf32>
    %596 = vector.broadcast %594 : vector<1x32xf32> to vector<10x32xf32>
    %597 = arith.mulf %595, %596 : vector<10x32xf32>
    %598 = arith.addf %592, %597 : vector<10x32xf32>
    %599 = vector.extract_strided_slice %551 {offsets = [0, 8], sizes = [10, 1], strides = [1, 1]} : vector<10x10xf32> to vector<10x1xf32>
    %600 = vector.extract_strided_slice %546 {offsets = [8, 0], sizes = [1, 32], strides = [1, 1]} : vector<10x32xf32> to vector<1x32xf32>
    %601 = vector.broadcast %599 : vector<10x1xf32> to vector<10x32xf32>
    %602 = vector.broadcast %600 : vector<1x32xf32> to vector<10x32xf32>
    %603 = arith.mulf %601, %602 : vector<10x32xf32>
    %604 = arith.addf %598, %603 : vector<10x32xf32>
    %605 = vector.extract_strided_slice %551 {offsets = [0, 9], sizes = [10, 1], strides = [1, 1]} : vector<10x10xf32> to vector<10x1xf32>
    %606 = vector.extract_strided_slice %546 {offsets = [9, 0], sizes = [1, 32], strides = [1, 1]} : vector<10x32xf32> to vector<1x32xf32>
    %607 = vector.broadcast %605 : vector<10x1xf32> to vector<10x32xf32>
    %608 = vector.broadcast %606 : vector<1x32xf32> to vector<10x32xf32>
    %609 = arith.mulf %607, %608 : vector<10x32xf32>
    %610 = arith.addf %604, %609 : vector<10x32xf32>
    %c6 = arith.constant 6 : index
    %c0_146 = arith.constant 0 : index
    %c0_147 = arith.constant 0 : index
    %611 = vector.load %arg5[%c6, %c0_146, %c0_147] : memref<8x10x1xf32, #tpu.memory_space<vmem>>, vector<1x10x1xf32>
    %612 = vector.shape_cast %611 : vector<1x10x1xf32> to vector<10x1xf32>
    %613 = vector.broadcast %612 : vector<10x1xf32> to vector<10x32xf32>
    %614 = arith.addf %610, %613 : vector<10x32xf32>
    %c6_148 = arith.constant 6 : index
    %c0_149 = arith.constant 0 : index
    %c0_150 = arith.constant 0 : index
    %615 = vector.load %arg13[%c6_148, %c0_149, %c0_150] : memref<8x10x32xf32, #tpu.memory_space<vmem>>, vector<1x10x32xf32>
    %616 = vector.shape_cast %615 : vector<1x10x32xf32> to vector<10x32xf32>
    %617 = vector.shape_cast %614 : vector<10x32xf32> to vector<1x10x32xf32>
    tpu.vector_store %arg13[%c6_148, %c0_149, %c0_150], %617 {strides = array<i32>} : memref<8x10x32xf32, #tpu.memory_space<vmem>>, vector<1x10x32xf32>,
    %c6_151 = arith.constant 6 : index
    %c0_152 = arith.constant 0 : index
    %c0_153 = arith.constant 0 : index
    %618 = vector.load %arg6[%c6_151, %c0_152, %c0_153] : memref<8x10x1xf32, #tpu.memory_space<vmem>>, vector<1x10x1xf32>
    %619 = vector.shape_cast %618 : vector<1x10x1xf32> to vector<10x1xf32>
    %c6_154 = arith.constant 6 : index
    %c0_155 = arith.constant 0 : index
    %c0_156 = arith.constant 0 : index
    %620 = vector.load %arg7[%c6_154, %c0_155, %c0_156] : memref<8x10x1xf32, #tpu.memory_space<vmem>>, vector<1x10x1xf32>
    %621 = vector.shape_cast %620 : vector<1x10x1xf32> to vector<10x1xf32>
    %cst_157 = arith.constant dense<0.000000e+00> : vector<10xf32>
    %622 = vector.multi_reduction <add>, %610, %cst_157 [1] : vector<10x32xf32> to vector<10xf32>
    %623 = vector.shape_cast %622 : vector<10xf32> to vector<10x1xf32>
    %cst_158 = arith.constant 3.125000e-02 : f32
    %624 = vector.broadcast %cst_158 : f32 to vector<10x1xf32>
    %625 = arith.mulf %623, %624 : vector<10x1xf32>
    %626 = arith.mulf %610, %610 : vector<10x32xf32>
    %cst_159 = arith.constant dense<0.000000e+00> : vector<10xf32>
    %627 = vector.multi_reduction <add>, %626, %cst_159 [1] : vector<10x32xf32> to vector<10xf32>
    %628 = vector.shape_cast %627 : vector<10xf32> to vector<10x1xf32>
    %cst_160 = arith.constant 3.125000e-02 : f32
    %629 = vector.broadcast %cst_160 : f32 to vector<10x1xf32>
    %630 = arith.mulf %628, %629 : vector<10x1xf32>
    %631 = arith.mulf %625, %625 : vector<10x1xf32>
    %632 = arith.subf %630, %631 : vector<10x1xf32>
    %cst_161 = arith.constant 9.99999974E-6 : f32
    %633 = vector.broadcast %cst_161 : f32 to vector<10x1xf32>
    %634 = arith.addf %632, %633 : vector<10x1xf32>
    %635 = math.rsqrt %634 : vector<10x1xf32>
    %636 = vector.broadcast %625 : vector<10x1xf32> to vector<10x32xf32>
    %637 = arith.subf %610, %636 : vector<10x32xf32>
    %638 = arith.mulf %635, %619 : vector<10x1xf32>
    %639 = vector.broadcast %638 : vector<10x1xf32> to vector<10x32xf32>
    %640 = arith.mulf %637, %639 : vector<10x32xf32>
    %641 = vector.broadcast %621 : vector<10x1xf32> to vector<10x32xf32>
    %642 = arith.addf %640, %641 : vector<10x32xf32>
    %643 = math.tanh %642 : vector<10x32xf32>
    %c6_162 = arith.constant 6 : index
    %c0_163 = arith.constant 0 : index
    %c0_164 = arith.constant 0 : index
    %644 = vector.load %arg12[%c6_162, %c0_163, %c0_164] : memref<8x10x32xf32, #tpu.memory_space<vmem>>, vector<1x10x32xf32>
    %645 = vector.shape_cast %644 : vector<1x10x32xf32> to vector<10x32xf32>
    %646 = vector.shape_cast %643 : vector<10x32xf32> to vector<1x10x32xf32>
    tpu.vector_store %arg12[%c6_162, %c0_163, %c0_164], %646 {strides = array<i32>} : memref<8x10x32xf32, #tpu.memory_space<vmem>>, vector<1x10x32xf32>,
    %c6_165 = arith.constant 6 : index
    %c0_166 = arith.constant 0 : index
    %c0_167 = arith.constant 0 : index
    %647 = vector.load %arg4[%c6_165, %c0_166, %c0_167] : memref<7x10x10xf32, #tpu.memory_space<vmem>>, vector<1x10x10xf32>
    %648 = vector.shape_cast %647 : vector<1x10x10xf32> to vector<10x10xf32>
    %649 = vector.extract_strided_slice %648 {offsets = [0, 0], sizes = [10, 1], strides = [1, 1]} : vector<10x10xf32> to vector<10x1xf32>
    %650 = vector.extract_strided_slice %643 {offsets = [0, 0], sizes = [1, 32], strides = [1, 1]} : vector<10x32xf32> to vector<1x32xf32>
    %651 = vector.broadcast %649 : vector<10x1xf32> to vector<10x32xf32>
    %652 = vector.broadcast %650 : vector<1x32xf32> to vector<10x32xf32>
    %653 = arith.mulf %651, %652 : vector<10x32xf32>
    %654 = vector.extract_strided_slice %648 {offsets = [0, 1], sizes = [10, 1], strides = [1, 1]} : vector<10x10xf32> to vector<10x1xf32>
    %655 = vector.extract_strided_slice %643 {offsets = [1, 0], sizes = [1, 32], strides = [1, 1]} : vector<10x32xf32> to vector<1x32xf32>
    %656 = vector.broadcast %654 : vector<10x1xf32> to vector<10x32xf32>
    %657 = vector.broadcast %655 : vector<1x32xf32> to vector<10x32xf32>
    %658 = arith.mulf %656, %657 : vector<10x32xf32>
    %659 = arith.addf %653, %658 : vector<10x32xf32>
    %660 = vector.extract_strided_slice %648 {offsets = [0, 2], sizes = [10, 1], strides = [1, 1]} : vector<10x10xf32> to vector<10x1xf32>
    %661 = vector.extract_strided_slice %643 {offsets = [2, 0], sizes = [1, 32], strides = [1, 1]} : vector<10x32xf32> to vector<1x32xf32>
    %662 = vector.broadcast %660 : vector<10x1xf32> to vector<10x32xf32>
    %663 = vector.broadcast %661 : vector<1x32xf32> to vector<10x32xf32>
    %664 = arith.mulf %662, %663 : vector<10x32xf32>
    %665 = arith.addf %659, %664 : vector<10x32xf32>
    %666 = vector.extract_strided_slice %648 {offsets = [0, 3], sizes = [10, 1], strides = [1, 1]} : vector<10x10xf32> to vector<10x1xf32>
    %667 = vector.extract_strided_slice %643 {offsets = [3, 0], sizes = [1, 32], strides = [1, 1]} : vector<10x32xf32> to vector<1x32xf32>
    %668 = vector.broadcast %666 : vector<10x1xf32> to vector<10x32xf32>
    %669 = vector.broadcast %667 : vector<1x32xf32> to vector<10x32xf32>
    %670 = arith.mulf %668, %669 : vector<10x32xf32>
    %671 = arith.addf %665, %670 : vector<10x32xf32>
    %672 = vector.extract_strided_slice %648 {offsets = [0, 4], sizes = [10, 1], strides = [1, 1]} : vector<10x10xf32> to vector<10x1xf32>
    %673 = vector.extract_strided_slice %643 {offsets = [4, 0], sizes = [1, 32], strides = [1, 1]} : vector<10x32xf32> to vector<1x32xf32>
    %674 = vector.broadcast %672 : vector<10x1xf32> to vector<10x32xf32>
    %675 = vector.broadcast %673 : vector<1x32xf32> to vector<10x32xf32>
    %676 = arith.mulf %674, %675 : vector<10x32xf32>
    %677 = arith.addf %671, %676 : vector<10x32xf32>
    %678 = vector.extract_strided_slice %648 {offsets = [0, 5], sizes = [10, 1], strides = [1, 1]} : vector<10x10xf32> to vector<10x1xf32>
    %679 = vector.extract_strided_slice %643 {offsets = [5, 0], sizes = [1, 32], strides = [1, 1]} : vector<10x32xf32> to vector<1x32xf32>
    %680 = vector.broadcast %678 : vector<10x1xf32> to vector<10x32xf32>
    %681 = vector.broadcast %679 : vector<1x32xf32> to vector<10x32xf32>
    %682 = arith.mulf %680, %681 : vector<10x32xf32>
    %683 = arith.addf %677, %682 : vector<10x32xf32>
    %684 = vector.extract_strided_slice %648 {offsets = [0, 6], sizes = [10, 1], strides = [1, 1]} : vector<10x10xf32> to vector<10x1xf32>
    %685 = vector.extract_strided_slice %643 {offsets = [6, 0], sizes = [1, 32], strides = [1, 1]} : vector<10x32xf32> to vector<1x32xf32>
    %686 = vector.broadcast %684 : vector<10x1xf32> to vector<10x32xf32>
    %687 = vector.broadcast %685 : vector<1x32xf32> to vector<10x32xf32>
    %688 = arith.mulf %686, %687 : vector<10x32xf32>
    %689 = arith.addf %683, %688 : vector<10x32xf32>
    %690 = vector.extract_strided_slice %648 {offsets = [0, 7], sizes = [10, 1], strides = [1, 1]} : vector<10x10xf32> to vector<10x1xf32>
    %691 = vector.extract_strided_slice %643 {offsets = [7, 0], sizes = [1, 32], strides = [1, 1]} : vector<10x32xf32> to vector<1x32xf32>
    %692 = vector.broadcast %690 : vector<10x1xf32> to vector<10x32xf32>
    %693 = vector.broadcast %691 : vector<1x32xf32> to vector<10x32xf32>
    %694 = arith.mulf %692, %693 : vector<10x32xf32>
    %695 = arith.addf %689, %694 : vector<10x32xf32>
    %696 = vector.extract_strided_slice %648 {offsets = [0, 8], sizes = [10, 1], strides = [1, 1]} : vector<10x10xf32> to vector<10x1xf32>
    %697 = vector.extract_strided_slice %643 {offsets = [8, 0], sizes = [1, 32], strides = [1, 1]} : vector<10x32xf32> to vector<1x32xf32>
    %698 = vector.broadcast %696 : vector<10x1xf32> to vector<10x32xf32>
    %699 = vector.broadcast %697 : vector<1x32xf32> to vector<10x32xf32>
    %700 = arith.mulf %698, %699 : vector<10x32xf32>
    %701 = arith.addf %695, %700 : vector<10x32xf32>
    %702 = vector.extract_strided_slice %648 {offsets = [0, 9], sizes = [10, 1], strides = [1, 1]} : vector<10x10xf32> to vector<10x1xf32>
    %703 = vector.extract_strided_slice %643 {offsets = [9, 0], sizes = [1, 32], strides = [1, 1]} : vector<10x32xf32> to vector<1x32xf32>
    %704 = vector.broadcast %702 : vector<10x1xf32> to vector<10x32xf32>
    %705 = vector.broadcast %703 : vector<1x32xf32> to vector<10x32xf32>
    %706 = arith.mulf %704, %705 : vector<10x32xf32>
    %707 = arith.addf %701, %706 : vector<10x32xf32>
    %c7 = arith.constant 7 : index
    %c0_168 = arith.constant 0 : index
    %c0_169 = arith.constant 0 : index
    %708 = vector.load %arg5[%c7, %c0_168, %c0_169] : memref<8x10x1xf32, #tpu.memory_space<vmem>>, vector<1x10x1xf32>
    %709 = vector.shape_cast %708 : vector<1x10x1xf32> to vector<10x1xf32>
    %710 = vector.broadcast %709 : vector<10x1xf32> to vector<10x32xf32>
    %711 = arith.addf %707, %710 : vector<10x32xf32>
    %c7_170 = arith.constant 7 : index
    %c0_171 = arith.constant 0 : index
    %c0_172 = arith.constant 0 : index
    %712 = vector.load %arg13[%c7_170, %c0_171, %c0_172] : memref<8x10x32xf32, #tpu.memory_space<vmem>>, vector<1x10x32xf32>
    %713 = vector.shape_cast %712 : vector<1x10x32xf32> to vector<10x32xf32>
    %714 = vector.shape_cast %711 : vector<10x32xf32> to vector<1x10x32xf32>
    tpu.vector_store %arg13[%c7_170, %c0_171, %c0_172], %714 {strides = array<i32>} : memref<8x10x32xf32, #tpu.memory_space<vmem>>, vector<1x10x32xf32>,
    %c7_173 = arith.constant 7 : index
    %c0_174 = arith.constant 0 : index
    %c0_175 = arith.constant 0 : index
    %715 = vector.load %arg6[%c7_173, %c0_174, %c0_175] : memref<8x10x1xf32, #tpu.memory_space<vmem>>, vector<1x10x1xf32>
    %716 = vector.shape_cast %715 : vector<1x10x1xf32> to vector<10x1xf32>
    %c7_176 = arith.constant 7 : index
    %c0_177 = arith.constant 0 : index
    %c0_178 = arith.constant 0 : index
    %717 = vector.load %arg7[%c7_176, %c0_177, %c0_178] : memref<8x10x1xf32, #tpu.memory_space<vmem>>, vector<1x10x1xf32>
    %718 = vector.shape_cast %717 : vector<1x10x1xf32> to vector<10x1xf32>
    %cst_179 = arith.constant dense<0.000000e+00> : vector<10xf32>
    %719 = vector.multi_reduction <add>, %707, %cst_179 [1] : vector<10x32xf32> to vector<10xf32>
    %720 = vector.shape_cast %719 : vector<10xf32> to vector<10x1xf32>
    %cst_180 = arith.constant 3.125000e-02 : f32
    %721 = vector.broadcast %cst_180 : f32 to vector<10x1xf32>
    %722 = arith.mulf %720, %721 : vector<10x1xf32>
    %723 = arith.mulf %707, %707 : vector<10x32xf32>
    %cst_181 = arith.constant dense<0.000000e+00> : vector<10xf32>
    %724 = vector.multi_reduction <add>, %723, %cst_181 [1] : vector<10x32xf32> to vector<10xf32>
    %725 = vector.shape_cast %724 : vector<10xf32> to vector<10x1xf32>
    %cst_182 = arith.constant 3.125000e-02 : f32
    %726 = vector.broadcast %cst_182 : f32 to vector<10x1xf32>
    %727 = arith.mulf %725, %726 : vector<10x1xf32>
    %728 = arith.mulf %722, %722 : vector<10x1xf32>
    %729 = arith.subf %727, %728 : vector<10x1xf32>
    %cst_183 = arith.constant 9.99999974E-6 : f32
    %730 = vector.broadcast %cst_183 : f32 to vector<10x1xf32>
    %731 = arith.addf %729, %730 : vector<10x1xf32>
    %732 = math.rsqrt %731 : vector<10x1xf32>
    %733 = vector.broadcast %722 : vector<10x1xf32> to vector<10x32xf32>
    %734 = arith.subf %707, %733 : vector<10x32xf32>
    %735 = arith.mulf %732, %716 : vector<10x1xf32>
    %736 = vector.broadcast %735 : vector<10x1xf32> to vector<10x32xf32>
    %737 = arith.mulf %734, %736 : vector<10x32xf32>
    %738 = vector.broadcast %718 : vector<10x1xf32> to vector<10x32xf32>
    %739 = arith.addf %737, %738 : vector<10x32xf32>
    %740 = math.tanh %739 : vector<10x32xf32>
    %c7_184 = arith.constant 7 : index
    %c0_185 = arith.constant 0 : index
    %c0_186 = arith.constant 0 : index
    %741 = vector.load %arg12[%c7_184, %c0_185, %c0_186] : memref<8x10x32xf32, #tpu.memory_space<vmem>>, vector<1x10x32xf32>
    %742 = vector.shape_cast %741 : vector<1x10x32xf32> to vector<10x32xf32>
    %743 = vector.shape_cast %740 : vector<10x32xf32> to vector<1x10x32xf32>
    tpu.vector_store %arg12[%c7_184, %c0_185, %c0_186], %743 {strides = array<i32>} : memref<8x10x32xf32, #tpu.memory_space<vmem>>, vector<1x10x32xf32>,
    %c0_187 = arith.constant 0 : index
    %c0_188 = arith.constant 0 : index
    %744 = vector.load %arg8[%c0_187, %c0_188] : memref<10x1xf32, #tpu.memory_space<vmem>>, vector<10x1xf32>
    %745 = vector.broadcast %744 : vector<10x1xf32> to vector<10x32xf32>
    %746 = arith.mulf %745, %740 : vector<10x32xf32>
    %cst_189 = arith.constant dense<0.000000e+00> : vector<32xf32>
    %747 = vector.multi_reduction <add>, %746, %cst_189 [0] : vector<10x32xf32> to vector<32xf32>
    %748 = vector.shape_cast %747 : vector<32xf32> to vector<1x32xf32>
    %c0_190 = arith.constant 0 : index
    %c0_191 = arith.constant 0 : index
    %749 = vector.load %arg9[%c0_190, %c0_191] : memref<1x1xf32, #tpu.memory_space<vmem>>, vector<1x1xf32>
    %750 = vector.broadcast %749 : vector<1x1xf32> to vector<1x32xf32>
    %751 = arith.addf %748, %750 : vector<1x32xf32>
    %c0_192 = arith.constant 0 : index
    %c0_193 = arith.constant 0 : index
    %752 = vector.load %arg10[%c0_192, %c0_193] : memref<1x32xf32, #tpu.memory_space<vmem>>, vector<1x32xf32>
    tpu.vector_store %arg10[%c0_192, %c0_193], %751 {strides = array<i32>} : memref<1x32xf32, #tpu.memory_space<vmem>>, vector<1x32xf32>,
    return
  }
}

</mosaic_0001>

<llo_original>
// kernel: net_forward.1
$region0: #{net_forward.1}
  #allocation0 [shape = 'u32[]', space=smem, size = 0x4, offset = 0x4, fixed_abs, tag = 'smem constant byte address 0x4 - core index']
  #allocation1 [shape = 'u32[144,128]{1,0:T(1,128)}', space=vmem, size = 0x12000, scoped, tag = 'internal scratch']
  #allocation2 [shape = 'f32[1,1]{1,0:T(1,128)S(1)}', space=vmem, size = 0x200, scoped, tag = 'scoped memory for net_forward.1']
  #allocation3 [shape = 'f32[1,1]{1,0:T(1,128)S(1)}', space=vmem, size = 0x200, scoped, tag = 'scoped memory for net_forward.1']
  #allocation4 [shape = 'f32[1,1]{1,0:T(1,128)S(1)}', space=vmem, size = 0x200, scoped, tag = 'scoped memory for net_forward.1']
  %s0 = inlined_call_operand.vmem [shape: f32[1,32], index: 0, kind: input, shape index: {}]
  %s1 = inlined_call_operand.<no memory space> [shape: f32[1,1], index: 1, kind: input, shape index: {}]
  %s2 = inlined_call_operand.<no memory space> [shape: f32[1,1], index: 2, kind: input, shape index: {}]
  %s3 = inlined_call_operand.vmem [shape: f32[10,1], index: 3, kind: input, shape index: {}]
  %s4 = inlined_call_operand.vmem [shape: f32[7,10,10], index: 4, kind: input, shape index: {}]
  %s5 = inlined_call_operand.vmem [shape: f32[8,10,1], index: 5, kind: input, shape index: {}]
  %s6 = inlined_call_operand.vmem [shape: f32[8,10,1], index: 6, kind: input, shape index: {}]
  %s7 = inlined_call_operand.vmem [shape: f32[8,10,1], index: 7, kind: input, shape index: {}]
  %s8 = inlined_call_operand.vmem [shape: f32[10,1], index: 8, kind: input, shape index: {}]
  %s9 = inlined_call_operand.<no memory space> [shape: f32[1,1], index: 9, kind: input, shape index: {}]
  %s10 = inlined_call_operand.hbm [shape: f32[1,32], index: 10, kind: output, shape index: {0}]
  %s11 = inlined_call_operand.hbm [shape: f32[1,32], index: 11, kind: output, shape index: {1}]
  %s12 = inlined_call_operand.vmem [shape: f32[8,10,32], index: 12, kind: output, shape index: {2}]
  %s13 = inlined_call_operand.vmem [shape: f32[8,10,32], index: 13, kind: output, shape index: {3}]
  %14 = xla_tuple %s10, %s11, %s12, %s13
  %s15 = sld [smem:[#allocation0]]
  $region74: #{net_forward.1} parent=0
    _
  %s17 = ssub.s32 1, %s15
  %s18 = scalar_select 0, %s17, %s15
  %v19 = vstv %s1
  %20 = vst [vmem:[#allocation2] sm:$0x1] %v19
  %v21 = vstv %s2
  %22 = vst [vmem:[#allocation3] sm:$0x1] %v21
  %v23 = vstv %s9
  %24 = vst [vmem:[#allocation4] sm:$0x1] %v23
  $region1: #{net_forward.1} parent=0
    #allocation5 [shape = 'u8[512]{0}', space=vmem, size = 0x400, scoped, tag = 'output window, operand 0, single buffered']
    #allocation6 [shape = 's32[1]{0}', space=sflag, size = 0x4, scoped, tag = 'scoped memory for net_forward.1']
    #allocation7 [shape = 'u8[512]{0}', space=vmem, size = 0x400, scoped, tag = 'output window, operand 1, single buffered']
    #allocation8 [shape = 's32[1]{0}', space=sflag, size = 0x4, scoped, tag = 'scoped memory for net_forward.1']
    %25 = vsyncpa [#allocation6], 0
    %26 = vsyncpa [#allocation8], 0
    // Predicated region
    $region2: #{net_forward.1} parent=1 // pred_check
      _
    $region3: #{net_forward.1} parent=1 // pred_check_branch
      %28 = sbr.rel (0) target = $region5
    $region4: #{net_forward.1} parent=1 // pred_region
      _
    $region5: #{net_forward.1} parent=1 // pred_fallthru
      _
    // Predicated region
    $region6: #{net_forward.1} parent=1 // pred_check
      _
    $region7: #{net_forward.1} parent=1 // pred_check_branch
      %30 = sbr.rel (0) target = $region9
    $region8: #{net_forward.1} parent=1 // pred_region
      _
    $region9: #{net_forward.1} parent=1 // pred_fallthru
      _
    // Predicated region
    $region10: #{net_forward.1} parent=1 // pred_check
      _
    $region11: #{net_forward.1} parent=1 // pred_check_branch
      %32 = sbr.rel (0) target = $region13
    $region12: #{net_forward.1} parent=1 // pred_region
      _
    $region13: #{net_forward.1} parent=1 // pred_fallthru
      _
    // Predicated region
    $region14: #{net_forward.1} parent=1 // pred_check
      _
    $region15: #{net_forward.1} parent=1 // pred_check_branch
      %34 = sbr.rel (0) target = $region17
    $region16: #{net_forward.1} parent=1 // pred_region
      _
    $region17: #{net_forward.1} parent=1 // pred_fallthru
      _
    // Predicated region
    $region18: #{net_forward.1} parent=1 // pred_check
      _
    $region19: #{net_forward.1} parent=1 // pred_check_branch
      %36 = sbr.rel (0) target = $region21
    $region20: #{net_forward.1} parent=1 // pred_region
      _
    $region21: #{net_forward.1} parent=1 // pred_fallthru
      _
    // Predicated region
    $region22: #{net_forward.1} parent=1 // pred_check
      _
    $region23: #{net_forward.1} parent=1 // pred_check_branch
      %38 = sbr.rel (0) target = $region25
    $region24: #{net_forward.1} parent=1 // pred_region
      _
    $region25: #{net_forward.1} parent=1 // pred_fallthru
      _
    // Predicated region
    $region26: #{net_forward.1} parent=1 // pred_check
      _
    $region27: #{net_forward.1} parent=1 // pred_check_branch
      %40 = sbr.rel (0) target = $region29
    $region28: #{net_forward.1} parent=1 // pred_region
      _
    $region29: #{net_forward.1} parent=1 // pred_fallthru
      _
    // Predicated region
    $region30: #{net_forward.1} parent=1 // pred_check
      _
    $region31: #{net_forward.1} parent=1 // pred_check_branch
      %42 = sbr.rel (0) target = $region33
    $region32: #{net_forward.1} parent=1 // pred_region
      _
    $region33: #{net_forward.1} parent=1 // pred_fallthru
      _
    // Predicated region
    $region34: #{net_forward.1} parent=1 // pred_check
      _
    $region35: #{net_forward.1} parent=1 // pred_check_branch
      %44 = sbr.rel (0) target = $region37
    $region36: #{net_forward.1} parent=1 // pred_region
      _
    $region37: #{net_forward.1} parent=1 // pred_fallthru
      _
    // Predicated region
    $region38: #{net_forward.1} parent=1 // pred_check
      _
    $region39: #{net_forward.1} parent=1 // pred_check_branch
      %46 = sbr.rel (0) target = $region41
    $region40: #{net_forward.1} parent=1 // pred_region
      _
    $region41: #{net_forward.1} parent=1 // pred_fallthru
      _
    %v47 = vld [vmem:[%s0] sm:$0x1]
    %v48 = vld [vmem:[#allocation2] sm:$0x1]
    %v49 = vld [vmem:[#allocation3] sm:$0x1]
    %vm50 = vcmask 253952
    %v51 = vsel %vm50, %v47, 0.0
    %52 = vadd.xlane.f32.xlu0 %v51
    %v53 = vpop.xlane.xlu0 %52
    %v54 = vmul.f32 %v53, 0.03125
    %v55 = vmul.f32 %v47, %v47
    %v56 = vsel %vm50, %v55, 0.0
    %57 = vadd.xlane.f32.xlu0 %v56
    %v58 = vpop.xlane.xlu0 %57
    %v59 = vmul.f32 %v58, 0.03125
    %v60 = vmul.f32 %v54, %v54
    %v61 = vsub.f32 %v59, %v60
    %v62 = vadd.f32 %v61, 1e-05
    %v63 = vrsqrt.pop %v62
    %v64 = vsub.f32 %v47, %v54
    %v65 = vmul.f32 %v63, %v48
    %67 = vset.pattern.permute.xlu0 0
    %68 = vperm.xlu0 %67, %v65
    %v69 = vpop.permute.xlu0 %68
    %v71 = vmul.f32 %v64, %v69
    %73 = vset.pattern.permute.xlu0 0
    %74 = vperm.xlu0 %73, %v49
    %v75 = vpop.permute.xlu0 %74
    %v77 = vlaneseq
    %v78 = vshrl.u32 %v77, 7
    %v79 = vsub.s32 0, %v78
    %v80 = vrot.slane %v75, %v79
    %v81 = vadd.f32 %v71, %v80
    %82 = vst.msk [vmem:[#allocation7] sm:$0x1] %vm50, %v81
    %v83 = vld [vmem:[%s3] sm:$0xff]
    %v84 = vld [vmem:[%s3 + $0x8] sm:$0x3]
    %86 = vset.pattern.permute.xlu0 0
    %87 = vperm.xlu0 %86, %v83
    %v88 = vpop.permute.xlu0 %87
    %91 = vset.pattern.permute.xlu0 0
    %92 = vperm.xlu0 %91, %v84
    %v93 = vpop.permute.xlu0 %92
    %v96 = vlaneseq
    %v97 = vshrl.u32 %v96, 7
    %v98 = vsub.s32 0, %v97
    %v99 = vrot.slane %v81, %v98
    %v101 = vmul.f32 %v88, %v99
    %v102 = vmul.f32 %v93, %v99
    %v103 = vld [vmem:[%s5] sm:$0xff]
    %v104 = vld [vmem:[%s5 + $0x8] sm:$0x3]
    %106 = vset.pattern.permute.xlu0 0
    %107 = vperm.xlu0 %106, %v103
    %v108 = vpop.permute.xlu0 %107
    %111 = vset.pattern.permute.xlu0 0
    %112 = vperm.xlu0 %111, %v104
    %v113 = vpop.permute.xlu0 %112
    %v115 = vadd.f32 %v101, %v108
    %v116 = vadd.f32 %v102, %v113
    %vm117 = vcmask 261120
    %118 = vst.msk [vmem:[%s13] sm:$0xff] %vm117, %v115
    %vm119 = vcmask 254976
    %120 = vst.msk [vmem:[%s13 + $0x8] sm:$0x3] %vm119, %v116
    %v121 = vld [vmem:[%s6] sm:$0xff]
    %v122 = vld [vmem:[%s6 + $0x8] sm:$0x3]
    %v123 = vld [vmem:[%s7] sm:$0xff]
    %v124 = vld [vmem:[%s7 + $0x8] sm:$0x3]
    %v125 = vsel %vm117, %v101, 0.0
    %126 = vadd.xlane.f32.xlu0 %v125
    %v127 = vpop.xlane.xlu0 %126
    %v128 = vsel %vm119, %v102, 0.0
    %129 = vadd.xlane.f32.xlu0 %v128
    %v130 = vpop.xlane.xlu0 %129
    %v131 = vmul.f32 %v127, 0.03125
    %v132 = vmul.f32 %v130, 0.03125
    %v133 = vmul.f32 %v101, %v101
    %v134 = vmul.f32 %v102, %v102
    %v135 = vsel %vm117, %v133, 0.0
    %136 = vadd.xlane.f32.xlu0 %v135
    %v137 = vpop.xlane.xlu0 %136
    %v138 = vsel %vm119, %v134, 0.0
    %139 = vadd.xlane.f32.xlu0 %v138
    %v140 = vpop.xlane.xlu0 %139
    %v141 = vmul.f32 %v137, 0.03125
    %v142 = vmul.f32 %v140, 0.03125
    %v143 = vmul.f32 %v131, %v131
    %v144 = vmul.f32 %v132, %v132
    %v145 = vsub.f32 %v141, %v143
    %v146 = vsub.f32 %v142, %v144
    %v147 = vadd.f32 %v145, 1e-05
    %v148 = vadd.f32 %v146, 1e-05
    %v149 = vrsqrt.pop %v147
    %v150 = vrsqrt.pop %v148
    %v151 = vsub.f32 %v101, %v131
    %v152 = vsub.f32 %v102, %v132
    %v153 = vmul.f32 %v149, %v121
    %v154 = vmul.f32 %v150, %v122
    %156 = vset.pattern.permute.xlu0 0
    %157 = vperm.xlu0 %156, %v153
    %v158 = vpop.permute.xlu0 %157
    %161 = vset.pattern.permute.xlu0 0
    %162 = vperm.xlu0 %161, %v154
    %v163 = vpop.permute.xlu0 %162
    %v165 = vmul.f32 %v151, %v158
    %v166 = vmul.f32 %v152, %v163
    %168 = vset.pattern.permute.xlu0 0
    %169 = vperm.xlu0 %168, %v123
    %v170 = vpop.permute.xlu0 %169
    %173 = vset.pattern.permute.xlu0 0
    %174 = vperm.xlu0 %173, %v124
    %v175 = vpop.permute.xlu0 %174
    %v177 = vadd.f32 %v165, %v170
    %v178 = vadd.f32 %v166, %v175
    %v179 = vtanh.pop %v177
    %v180 = vtanh.pop %v178
    %181 = vst.msk [vmem:[%s12] sm:$0xff] %vm117, %v179
    %182 = vst.msk [vmem:[%s12 + $0x8] sm:$0x3] %vm119, %v180
    %v183 = vld [vmem:[%s4] sm:$0xff]
    %v184 = vld [vmem:[%s4 + $0x8] sm:$0x3]
    %186 = vset.pattern.permute.xlu0 0
    %187 = vperm.xlu0 %186, %v183
    %v188 = vpop.permute.xlu0 %187
    %191 = vset.pattern.permute.xlu0 0
    %192 = vperm.xlu0 %191, %v184
    %v193 = vpop.permute.xlu0 %192
    %v195 = vlaneseq
    %v196 = vshrl.u32 %v195, 7
    %v197 = vsub.s32 0, %v196
    %v198 = vrot.slane %v179, %v197
    %v199 = vmul.f32 %v188, %v198
    %v200 = vmul.f32 %v193, %v198
    %201 = vset.pattern.permute.xlu0 1
    %202 = vperm.xlu0 %201, %v183
    %v203 = vpop.permute.xlu0 %202
    %205 = vset.pattern.permute.xlu0 1
    %206 = vperm.xlu0 %205, %v184
    %v207 = vpop.permute.xlu0 %206
    %v209 = vlaneseq
    %v210 = vshrl.u32 %v209, 7
    %v211 = vsub.s32 1, %v210
    %v212 = vrot.slane %v179, %v211
    %v213 = vmul.f32 %v203, %v212
    %v214 = vmul.f32 %v207, %v212
    %v215 = vadd.f32 %v199, %v213
    %v216 = vadd.f32 %v200, %v214
    %217 = vset.pattern.permute.xlu0 2
    %218 = vperm.xlu0 %217, %v183
    %v219 = vpop.permute.xlu0 %218
    %221 = vset.pattern.permute.xlu0 2
    %222 = vperm.xlu0 %221, %v184
    %v223 = vpop.permute.xlu0 %222
    %v225 = vlaneseq
    %v226 = vshrl.u32 %v225, 7
    %v227 = vsub.s32 2, %v226
    %v228 = vrot.slane %v179, %v227
    %v229 = vmul.f32 %v219, %v228
    %v230 = vmul.f32 %v223, %v228
    %v231 = vadd.f32 %v215, %v229
    %v232 = vadd.f32 %v216, %v230
    %233 = vset.pattern.permute.xlu0 3
    %234 = vperm.xlu0 %233, %v183
    %v235 = vpop.permute.xlu0 %234
    %237 = vset.pattern.permute.xlu0 3
    %238 = vperm.xlu0 %237, %v184
    %v239 = vpop.permute.xlu0 %238
    %v241 = vlaneseq
    %v242 = vshrl.u32 %v241, 7
    %v243 = vsub.s32 3, %v242
    %v244 = vrot.slane %v179, %v243
    %v245 = vmul.f32 %v235, %v244
    %v246 = vmul.f32 %v239, %v244
    %v247 = vadd.f32 %v231, %v245
    %v248 = vadd.f32 %v232, %v246
    %249 = vset.pattern.permute.xlu0 4
    %250 = vperm.xlu0 %249, %v183
    %v251 = vpop.permute.xlu0 %250
    %253 = vset.pattern.permute.xlu0 4
    %254 = vperm.xlu0 %253, %v184
    %v255 = vpop.permute.xlu0 %254
    %v257 = vlaneseq
    %v258 = vshrl.u32 %v257, 7
    %v259 = vsub.s32 4, %v258
    %v260 = vrot.slane %v179, %v259
    %v261 = vmul.f32 %v251, %v260
    %v262 = vmul.f32 %v255, %v260
    %v263 = vadd.f32 %v247, %v261
    %v264 = vadd.f32 %v248, %v262
    %265 = vset.pattern.permute.xlu0 5
    %266 = vperm.xlu0 %265, %v183
    %v267 = vpop.permute.xlu0 %266
    %269 = vset.pattern.permute.xlu0 5
    %270 = vperm.xlu0 %269, %v184
    %v271 = vpop.permute.xlu0 %270
    %v273 = vlaneseq
    %v274 = vshrl.u32 %v273, 7
    %v275 = vsub.s32 5, %v274
    %v276 = vrot.slane %v179, %v275
    %v277 = vmul.f32 %v267, %v276
    %v278 = vmul.f32 %v271, %v276
    %v279 = vadd.f32 %v263, %v277
    %v280 = vadd.f32 %v264, %v278
    %281 = vset.pattern.permute.xlu0 6
    %282 = vperm.xlu0 %281, %v183
    %v283 = vpop.permute.xlu0 %282
    %285 = vset.pattern.permute.xlu0 6
    %286 = vperm.xlu0 %285, %v184
    %v287 = vpop.permute.xlu0 %286
    %v289 = vlaneseq
    %v290 = vshrl.u32 %v289, 7
    %v291 = vsub.s32 6, %v290
    %v292 = vrot.slane %v179, %v291
    %v293 = vmul.f32 %v283, %v292
    %v294 = vmul.f32 %v287, %v292
    %v295 = vadd.f32 %v279, %v293
    %v296 = vadd.f32 %v280, %v294
    %297 = vset.pattern.permute.xlu0 7
    %298 = vperm.xlu0 %297, %v183
    %v299 = vpop.permute.xlu0 %298
    %301 = vset.pattern.permute.xlu0 7
    %302 = vperm.xlu0 %301, %v184
    %v303 = vpop.permute.xlu0 %302
    %v305 = vlaneseq
    %v306 = vshrl.u32 %v305, 7
    %v307 = vsub.s32 7, %v306
    %v308 = vrot.slane %v179, %v307
    %v309 = vmul.f32 %v299, %v308
    %v310 = vmul.f32 %v303, %v308
    %v311 = vadd.f32 %v295, %v309
    %v312 = vadd.f32 %v296, %v310
    %313 = vset.pattern.permute.xlu0 8
    %314 = vperm.xlu0 %313, %v183
    %v315 = vpop.permute.xlu0 %314
    %317 = vset.pattern.permute.xlu0 8
    %318 = vperm.xlu0 %317, %v184
    %v319 = vpop.permute.xlu0 %318
    %v321 = vlaneseq
    %v322 = vshrl.u32 %v321, 7
    %v323 = vsub.s32 0, %v322
    %v324 = vrot.slane %v180, %v323
    %v325 = vmul.f32 %v315, %v324
    %v326 = vmul.f32 %v319, %v324
    %v327 = vadd.f32 %v311, %v325
    %v328 = vadd.f32 %v312, %v326
    %329 = vset.pattern.permute.xlu0 9
    %330 = vperm.xlu0 %329, %v183
    %v331 = vpop.permute.xlu0 %330
    %333 = vset.pattern.permute.xlu0 9
    %334 = vperm.xlu0 %333, %v184
    %v335 = vpop.permute.xlu0 %334
    %v337 = vlaneseq
    %v338 = vshrl.u32 %v337, 7
    %v339 = vsub.s32 1, %v338
    %v340 = vrot.slane %v180, %v339
    %v341 = vmul.f32 %v331, %v340
    %v342 = vmul.f32 %v335, %v340
    %v343 = vadd.f32 %v327, %v341
    %v344 = vadd.f32 %v328, %v342
    %s345 = scalar_lea.vmem %s5, 16
    %v346 = vld [vmem:[%s345] sm:$0xff]
    %v347 = vld [vmem:[%s345 + $0x8] sm:$0x3]
    %349 = vset.pattern.permute.xlu0 0
    %350 = vperm.xlu0 %349, %v346
    %v351 = vpop.permute.xlu0 %350
    %354 = vset.pattern.permute.xlu0 0
    %355 = vperm.xlu0 %354, %v347
    %v356 = vpop.permute.xlu0 %355
    %v358 = vadd.f32 %v343, %v351
    %v359 = vadd.f32 %v344, %v356
    %s360 = scalar_lea.vmem %s13, 16
    %361 = vst.msk [vmem:[%s360] sm:$0xff] %vm117, %v358
    %362 = vst.msk [vmem:[%s360 + $0x8] sm:$0x3] %vm119, %v359
    %s363 = scalar_lea.vmem %s6, 16
    %v364 = vld [vmem:[%s363] sm:$0xff]
    %v365 = vld [vmem:[%s363 + $0x8] sm:$0x3]
    %s366 = scalar_lea.vmem %s7, 16
    %v367 = vld [vmem:[%s366] sm:$0xff]
    %v368 = vld [vmem:[%s366 + $0x8] sm:$0x3]
    %v369 = vsel %vm117, %v343, 0.0
    %370 = vadd.xlane.f32.xlu0 %v369
    %v371 = vpop.xlane.xlu0 %370
    %v372 = vsel %vm119, %v344, 0.0
    %373 = vadd.xlane.f32.xlu0 %v372
    %v374 = vpop.xlane.xlu0 %373
    %v375 = vmul.f32 %v371, 0.03125
    %v376 = vmul.f32 %v374, 0.03125
    %v377 = vmul.f32 %v343, %v343
    %v378 = vmul.f32 %v344, %v344
    %v379 = vsel %vm117, %v377, 0.0
    %380 = vadd.xlane.f32.xlu0 %v379
    %v381 = vpop.xlane.xlu0 %380
    %v382 = vsel %vm119, %v378, 0.0
    %383 = vadd.xlane.f32.xlu0 %v382
    %v384 = vpop.xlane.xlu0 %383
    %v385 = vmul.f32 %v381, 0.03125
    %v386 = vmul.f32 %v384, 0.03125
    %v387 = vmul.f32 %v375, %v375
    %v388 = vmul.f32 %v376, %v376
    %v389 = vsub.f32 %v385, %v387
    %v390 = vsub.f32 %v386, %v388
    %v391 = vadd.f32 %v389, 1e-05
    %v392 = vadd.f32 %v390, 1e-05
    %v393 = vrsqrt.pop %v391
    %v394 = vrsqrt.pop %v392
    %v395 = vsub.f32 %v343, %v375
    %v396 = vsub.f32 %v344, %v376
    %v397 = vmul.f32 %v393, %v364
    %v398 = vmul.f32 %v394, %v365
    %400 = vset.pattern.permute.xlu0 0
    %401 = vperm.xlu0 %400, %v397
    %v402 = vpop.permute.xlu0 %401
    %405 = vset.pattern.permute.xlu0 0
    %406 = vperm.xlu0 %405, %v398
    %v407 = vpop.permute.xlu0 %406
    %v409 = vmul.f32 %v395, %v402
    %v410 = vmul.f32 %v396, %v407
    %412 = vset.pattern.permute.xlu0 0
    %413 = vperm.xlu0 %412, %v367
    %v414 = vpop.permute.xlu0 %413
    %417 = vset.pattern.permute.xlu0 0
    %418 = vperm.xlu0 %417, %v368
    %v419 = vpop.permute.xlu0 %418
    %v421 = vadd.f32 %v409, %v414
    %v422 = vadd.f32 %v410, %v419
    %v423 = vtanh.pop %v421
    %v424 = vtanh.pop %v422
    %s425 = scalar_lea.vmem %s12, 16
    %426 = vst.msk [vmem:[%s425] sm:$0xff] %vm117, %v423
    %427 = vst.msk [vmem:[%s425 + $0x8] sm:$0x3] %vm119, %v424
    %s428 = scalar_lea.vmem %s4, 16
    %v429 = vld [vmem:[%s428] sm:$0xff]
    %v430 = vld [vmem:[%s428 + $0x8] sm:$0x3]
    %432 = vset.pattern.permute.xlu0 0
    %433 = vperm.xlu0 %432, %v429
    %v434 = vpop.permute.xlu0 %433
    %437 = vset.pattern.permute.xlu0 0
    %438 = vperm.xlu0 %437, %v430
    %v439 = vpop.permute.xlu0 %438
    %v441 = vlaneseq
    %v442 = vshrl.u32 %v441, 7
    %v443 = vsub.s32 0, %v442
    %v444 = vrot.slane %v423, %v443
    %v445 = vmul.f32 %v434, %v444
    %v446 = vmul.f32 %v439, %v444
    %447 = vset.pattern.permute.xlu0 1
    %448 = vperm.xlu0 %447, %v429
    %v449 = vpop.permute.xlu0 %448
    %451 = vset.pattern.permute.xlu0 1
    %452 = vperm.xlu0 %451, %v430
    %v453 = vpop.permute.xlu0 %452
    %v455 = vlaneseq
    %v456 = vshrl.u32 %v455, 7
    %v457 = vsub.s32 1, %v456
    %v458 = vrot.slane %v423, %v457
    %v459 = vmul.f32 %v449, %v458
    %v460 = vmul.f32 %v453, %v458
    %v461 = vadd.f32 %v445, %v459
    %v462 = vadd.f32 %v446, %v460
    %463 = vset.pattern.permute.xlu0 2
    %464 = vperm.xlu0 %463, %v429
    %v465 = vpop.permute.xlu0 %464
    %467 = vset.pattern.permute.xlu0 2
    %468 = vperm.xlu0 %467, %v430
    %v469 = vpop.permute.xlu0 %468
    %v471 = vlaneseq
    %v472 = vshrl.u32 %v471, 7
    %v473 = vsub.s32 2, %v472
    %v474 = vrot.slane %v423, %v473
    %v475 = vmul.f32 %v465, %v474
    %v476 = vmul.f32 %v469, %v474
    %v477 = vadd.f32 %v461, %v475
    %v478 = vadd.f32 %v462, %v476
    %479 = vset.pattern.permute.xlu0 3
    %480 = vperm.xlu0 %479, %v429
    %v481 = vpop.permute.xlu0 %480
    %483 = vset.pattern.permute.xlu0 3
    %484 = vperm.xlu0 %483, %v430
    %v485 = vpop.permute.xlu0 %484
    %v487 = vlaneseq
    %v488 = vshrl.u32 %v487, 7
    %v489 = vsub.s32 3, %v488
    %v490 = vrot.slane %v423, %v489
    %v491 = vmul.f32 %v481, %v490
    %v492 = vmul.f32 %v485, %v490
    %v493 = vadd.f32 %v477, %v491
    %v494 = vadd.f32 %v478, %v492
    %495 = vset.pattern.permute.xlu0 4
    %496 = vperm.xlu0 %495, %v429
    %v497 = vpop.permute.xlu0 %496
    %499 = vset.pattern.permute.xlu0 4
    %500 = vperm.xlu0 %499, %v430
    %v501 = vpop.permute.xlu0 %500
    %v503 = vlaneseq
    %v504 = vshrl.u32 %v503, 7
    %v505 = vsub.s32 4, %v504
    %v506 = vrot.slane %v423, %v505
    %v507 = vmul.f32 %v497, %v506
    %v508 = vmul.f32 %v501, %v506
    %v509 = vadd.f32 %v493, %v507
    %v510 = vadd.f32 %v494, %v508
    %511 = vset.pattern.permute.xlu0 5
    %512 = vperm.xlu0 %511, %v429
    %v513 = vpop.permute.xlu0 %512
    %515 = vset.pattern.permute.xlu0 5
    %516 = vperm.xlu0 %515, %v430
    %v517 = vpop.permute.xlu0 %516
    %v519 = vlaneseq
    %v520 = vshrl.u32 %v519, 7
    %v521 = vsub.s32 5, %v520
    %v522 = vrot.slane %v423, %v521
    %v523 = vmul.f32 %v513, %v522
    %v524 = vmul.f32 %v517, %v522
    %v525 = vadd.f32 %v509, %v523
    %v526 = vadd.f32 %v510, %v524
    %527 = vset.pattern.permute.xlu0 6
    %528 = vperm.xlu0 %527, %v429
    %v529 = vpop.permute.xlu0 %528
    %531 = vset.pattern.permute.xlu0 6
    %532 = vperm.xlu0 %531, %v430
    %v533 = vpop.permute.xlu0 %532
    %v535 = vlaneseq
    %v536 = vshrl.u32 %v535, 7
    %v537 = vsub.s32 6, %v536
    %v538 = vrot.slane %v423, %v537
    %v539 = vmul.f32 %v529, %v538
    %v540 = vmul.f32 %v533, %v538
    %v541 = vadd.f32 %v525, %v539
    %v542 = vadd.f32 %v526, %v540
    %543 = vset.pattern.permute.xlu0 7
    %544 = vperm.xlu0 %543, %v429
    %v545 = vpop.permute.xlu0 %544
    %547 = vset.pattern.permute.xlu0 7
    %548 = vperm.xlu0 %547, %v430
    %v549 = vpop.permute.xlu0 %548
    %v551 = vlaneseq
    %v552 = vshrl.u32 %v551, 7
    %v553 = vsub.s32 7, %v552
    %v554 = vrot.slane %v423, %v553
    %v555 = vmul.f32 %v545, %v554
    %v556 = vmul.f32 %v549, %v554
    %v557 = vadd.f32 %v541, %v555
    %v558 = vadd.f32 %v542, %v556
    %559 = vset.pattern.permute.xlu0 8
    %560 = vperm.xlu0 %559, %v429
    %v561 = vpop.permute.xlu0 %560
    %563 = vset.pattern.permute.xlu0 8
    %564 = vperm.xlu0 %563, %v430
    %v565 = vpop.permute.xlu0 %564
    %v567 = vlaneseq
    %v568 = vshrl.u32 %v567, 7
    %v569 = vsub.s32 0, %v568
    %v570 = vrot.slane %v424, %v569
    %v571 = vmul.f32 %v561, %v570
    %v572 = vmul.f32 %v565, %v570
    %v573 = vadd.f32 %v557, %v571
    %v574 = vadd.f32 %v558, %v572
    %575 = vset.pattern.permute.xlu0 9
    %576 = vperm.xlu0 %575, %v429
    %v577 = vpop.permute.xlu0 %576
    %579 = vset.pattern.permute.xlu0 9
    %580 = vperm.xlu0 %579, %v430
    %v581 = vpop.permute.xlu0 %580
    %v583 = vlaneseq
    %v584 = vshrl.u32 %v583, 7
    %v585 = vsub.s32 1, %v584
    %v586 = vrot.slane %v424, %v585
    %v587 = vmul.f32 %v577, %v586
    %v588 = vmul.f32 %v581, %v586
    %v589 = vadd.f32 %v573, %v587
    %v590 = vadd.f32 %v574, %v588
    %s591 = scalar_lea.vmem %s5, 32
    %v592 = vld [vmem:[%s591] sm:$0xff]
    %v593 = vld [vmem:[%s591 + $0x8] sm:$0x3]
    %595 = vset.pattern.permute.xlu0 0
    %596 = vperm.xlu0 %595, %v592
    %v597 = vpop.permute.xlu0 %596
    %600 = vset.pattern.permute.xlu0 0
    %601 = vperm.xlu0 %600, %v593
    %v602 = vpop.permute.xlu0 %601
    %v604 = vadd.f32 %v589, %v597
    %v605 = vadd.f32 %v590, %v602
    %s606 = scalar_lea.vmem %s13, 32
    %607 = vst.msk [vmem:[%s606] sm:$0xff] %vm117, %v604
    %608 = vst.msk [vmem:[%s606 + $0x8] sm:$0x3] %vm119, %v605
    %s609 = scalar_lea.vmem %s6, 32
    %v610 = vld [vmem:[%s609] sm:$0xff]
    %v611 = vld [vmem:[%s609 + $0x8] sm:$0x3]
    %s612 = scalar_lea.vmem %s7, 32
    %v613 = vld [vmem:[%s612] sm:$0xff]
    %v614 = vld [vmem:[%s612 + $0x8] sm:$0x3]
    %v615 = vsel %vm117, %v589, 0.0
    %616 = vadd.xlane.f32.xlu0 %v615
    %v617 = vpop.xlane.xlu0 %616
    %v618 = vsel %vm119, %v590, 0.0
    %619 = vadd.xlane.f32.xlu0 %v618
    %v620 = vpop.xlane.xlu0 %619
    %v621 = vmul.f32 %v617, 0.03125
    %v622 = vmul.f32 %v620, 0.03125
    %v623 = vmul.f32 %v589, %v589
    %v624 = vmul.f32 %v590, %v590
    %v625 = vsel %vm117, %v623, 0.0
    %626 = vadd.xlane.f32.xlu0 %v625
    %v627 = vpop.xlane.xlu0 %626
    %v628 = vsel %vm119, %v624, 0.0
    %629 = vadd.xlane.f32.xlu0 %v628
    %v630 = vpop.xlane.xlu0 %629
    %v631 = vmul.f32 %v627, 0.03125
    %v632 = vmul.f32 %v630, 0.03125
    %v633 = vmul.f32 %v621, %v621
    %v634 = vmul.f32 %v622, %v622
    %v635 = vsub.f32 %v631, %v633
    %v636 = vsub.f32 %v632, %v634
    %v637 = vadd.f32 %v635, 1e-05
    %v638 = vadd.f32 %v636, 1e-05
    %v639 = vrsqrt.pop %v637
    %v640 = vrsqrt.pop %v638
    %v641 = vsub.f32 %v589, %v621
    %v642 = vsub.f32 %v590, %v622
    %v643 = vmul.f32 %v639, %v610
    %v644 = vmul.f32 %v640, %v611
    %646 = vset.pattern.permute.xlu0 0
    %647 = vperm.xlu0 %646, %v643
    %v648 = vpop.permute.xlu0 %647
    %651 = vset.pattern.permute.xlu0 0
    %652 = vperm.xlu0 %651, %v644
    %v653 = vpop.permute.xlu0 %652
    %v655 = vmul.f32 %v641, %v648
    %v656 = vmul.f32 %v642, %v653
    %658 = vset.pattern.permute.xlu0 0
    %659 = vperm.xlu0 %658, %v613
    %v660 = vpop.permute.xlu0 %659
    %663 = vset.pattern.permute.xlu0 0
    %664 = vperm.xlu0 %663, %v614
    %v665 = vpop.permute.xlu0 %664
    %v667 = vadd.f32 %v655, %v660
    %v668 = vadd.f32 %v656, %v665
    %v669 = vtanh.pop %v667
    %v670 = vtanh.pop %v668
    %s671 = scalar_lea.vmem %s12, 32
    %672 = vst.msk [vmem:[%s671] sm:$0xff] %vm117, %v669
    %673 = vst.msk [vmem:[%s671 + $0x8] sm:$0x3] %vm119, %v670
    %s674 = scalar_lea.vmem %s4, 32
    %v675 = vld [vmem:[%s674] sm:$0xff]
    %v676 = vld [vmem:[%s674 + $0x8] sm:$0x3]
    %678 = vset.pattern.permute.xlu0 0
    %679 = vperm.xlu0 %678, %v675
    %v680 = vpop.permute.xlu0 %679
    %683 = vset.pattern.permute.xlu0 0
    %684 = vperm.xlu0 %683, %v676
    %v685 = vpop.permute.xlu0 %684
    %v687 = vlaneseq
    %v688 = vshrl.u32 %v687, 7
    %v689 = vsub.s32 0, %v688
    %v690 = vrot.slane %v669, %v689
    %v691 = vmul.f32 %v680, %v690
    %v692 = vmul.f32 %v685, %v690
    %693 = vset.pattern.permute.xlu0 1
    %694 = vperm.xlu0 %693, %v675
    %v695 = vpop.permute.xlu0 %694
    %697 = vset.pattern.permute.xlu0 1
    %698 = vperm.xlu0 %697, %v676
    %v699 = vpop.permute.xlu0 %698
    %v701 = vlaneseq
    %v702 = vshrl.u32 %v701, 7
    %v703 = vsub.s32 1, %v702
    %v704 = vrot.slane %v669, %v703
    %v705 = vmul.f32 %v695, %v704
    %v706 = vmul.f32 %v699, %v704
    %v707 = vadd.f32 %v691, %v705
    %v708 = vadd.f32 %v692, %v706
    %709 = vset.pattern.permute.xlu0 2
    %710 = vperm.xlu0 %709, %v675
    %v711 = vpop.permute.xlu0 %710
    %713 = vset.pattern.permute.xlu0 2
    %714 = vperm.xlu0 %713, %v676
    %v715 = vpop.permute.xlu0 %714
    %v717 = vlaneseq
    %v718 = vshrl.u32 %v717, 7
    %v719 = vsub.s32 2, %v718
    %v720 = vrot.slane %v669, %v719
    %v721 = vmul.f32 %v711, %v720
    %v722 = vmul.f32 %v715, %v720
    %v723 = vadd.f32 %v707, %v721
    %v724 = vadd.f32 %v708, %v722
    %725 = vset.pattern.permute.xlu0 3
    %726 = vperm.xlu0 %725, %v675
    %v727 = vpop.permute.xlu0 %726
    %729 = vset.pattern.permute.xlu0 3
    %730 = vperm.xlu0 %729, %v676
    %v731 = vpop.permute.xlu0 %730
    %v733 = vlaneseq
    %v734 = vshrl.u32 %v733, 7
    %v735 = vsub.s32 3, %v734
    %v736 = vrot.slane %v669, %v735
    %v737 = vmul.f32 %v727, %v736
    %v738 = vmul.f32 %v731, %v736
    %v739 = vadd.f32 %v723, %v737
    %v740 = vadd.f32 %v724, %v738
    %741 = vset.pattern.permute.xlu0 4
    %742 = vperm.xlu0 %741, %v675
    %v743 = vpop.permute.xlu0 %742
    %745 = vset.pattern.permute.xlu0 4
    %746 = vperm.xlu0 %745, %v676
    %v747 = vpop.permute.xlu0 %746
    %v749 = vlaneseq
    %v750 = vshrl.u32 %v749, 7
    %v751 = vsub.s32 4, %v750
    %v752 = vrot.slane %v669, %v751
    %v753 = vmul.f32 %v743, %v752
    %v754 = vmul.f32 %v747, %v752
    %v755 = vadd.f32 %v739, %v753
    %v756 = vadd.f32 %v740, %v754
    %757 = vset.pattern.permute.xlu0 5
    %758 = vperm.xlu0 %757, %v675
    %v759 = vpop.permute.xlu0 %758
    %761 = vset.pattern.permute.xlu0 5
    %762 = vperm.xlu0 %761, %v676
    %v763 = vpop.permute.xlu0 %762
    %v765 = vlaneseq
    %v766 = vshrl.u32 %v765, 7
    %v767 = vsub.s32 5, %v766
    %v768 = vrot.slane %v669, %v767
    %v769 = vmul.f32 %v759, %v768
    %v770 = vmul.f32 %v763, %v768
    %v771 = vadd.f32 %v755, %v769
    %v772 = vadd.f32 %v756, %v770
    %773 = vset.pattern.permute.xlu0 6
    %774 = vperm.xlu0 %773, %v675
    %v775 = vpop.permute.xlu0 %774
    %777 = vset.pattern.permute.xlu0 6
    %778 = vperm.xlu0 %777, %v676
    %v779 = vpop.permute.xlu0 %778
    %v781 = vlaneseq
    %v782 = vshrl.u32 %v781, 7
    %v783 = vsub.s32 6, %v782
    %v784 = vrot.slane %v669, %v783
    %v785 = vmul.f32 %v775, %v784
    %v786 = vmul.f32 %v779, %v784
    %v787 = vadd.f32 %v771, %v785
    %v788 = vadd.f32 %v772, %v786
    %789 = vset.pattern.permute.xlu0 7
    %790 = vperm.xlu0 %789, %v675
    %v791 = vpop.permute.xlu0 %790
    %793 = vset.pattern.permute.xlu0 7
    %794 = vperm.xlu0 %793, %v676
    %v795 = vpop.permute.xlu0 %794
    %v797 = vlaneseq
    %v798 = vshrl.u32 %v797, 7
    %v799 = vsub.s32 7, %v798
    %v800 = vrot.slane %v669, %v799
    %v801 = vmul.f32 %v791, %v800
    %v802 = vmul.f32 %v795, %v800
    %v803 = vadd.f32 %v787, %v801
    %v804 = vadd.f32 %v788, %v802
    %805 = vset.pattern.permute.xlu0 8
    %806 = vperm.xlu0 %805, %v675
    %v807 = vpop.permute.xlu0 %806
    %809 = vset.pattern.permute.xlu0 8
    %810 = vperm.xlu0 %809, %v676
    %v811 = vpop.permute.xlu0 %810
    %v813 = vlaneseq
    %v814 = vshrl.u32 %v813, 7
    %v815 = vsub.s32 0, %v814
    %v816 = vrot.slane %v670, %v815
    %v817 = vmul.f32 %v807, %v816
    %v818 = vmul.f32 %v811, %v816
    %v819 = vadd.f32 %v803, %v817
    %v820 = vadd.f32 %v804, %v818
    %821 = vset.pattern.permute.xlu0 9
    %822 = vperm.xlu0 %821, %v675
    %v823 = vpop.permute.xlu0 %822
    %825 = vset.pattern.permute.xlu0 9
    %826 = vperm.xlu0 %825, %v676
    %v827 = vpop.permute.xlu0 %826
    %v829 = vlaneseq
    %v830 = vshrl.u32 %v829, 7
    %v831 = vsub.s32 1, %v830
    %v832 = vrot.slane %v670, %v831
    %v833 = vmul.f32 %v823, %v832
    %v834 = vmul.f32 %v827, %v832
    %v835 = vadd.f32 %v819, %v833
    %v836 = vadd.f32 %v820, %v834
    %s837 = scalar_lea.vmem %s5, 48
    %v838 = vld [vmem:[%s837] sm:$0xff]
    %v839 = vld [vmem:[%s837 + $0x8] sm:$0x3]
    %841 = vset.pattern.permute.xlu0 0
    %842 = vperm.xlu0 %841, %v838
    %v843 = vpop.permute.xlu0 %842
    %846 = vset.pattern.permute.xlu0 0
    %847 = vperm.xlu0 %846, %v839
    %v848 = vpop.permute.xlu0 %847
    %v850 = vadd.f32 %v835, %v843
    %v851 = vadd.f32 %v836, %v848
    %s852 = scalar_lea.vmem %s13, 48
    %853 = vst.msk [vmem:[%s852] sm:$0xff] %vm117, %v850
    %854 = vst.msk [vmem:[%s852 + $0x8] sm:$0x3] %vm119, %v851
    %s855 = scalar_lea.vmem %s6, 48
    %v856 = vld [vmem:[%s855] sm:$0xff]
    %v857 = vld [vmem:[%s855 + $0x8] sm:$0x3]
    %s858 = scalar_lea.vmem %s7, 48
    %v859 = vld [vmem:[%s858] sm:$0xff]
    %v860 = vld [vmem:[%s858 + $0x8] sm:$0x3]
    %v861 = vsel %vm117, %v835, 0.0
    %862 = vadd.xlane.f32.xlu0 %v861
    %v863 = vpop.xlane.xlu0 %862
    %v864 = vsel %vm119, %v836, 0.0
    %865 = vadd.xlane.f32.xlu0 %v864
    %v866 = vpop.xlane.xlu0 %865
    %v867 = vmul.f32 %v863, 0.03125
    %v868 = vmul.f32 %v866, 0.03125
    %v869 = vmul.f32 %v835, %v835
    %v870 = vmul.f32 %v836, %v836
    %v871 = vsel %vm117, %v869, 0.0
    %872 = vadd.xlane.f32.xlu0 %v871
    %v873 = vpop.xlane.xlu0 %872
    %v874 = vsel %vm119, %v870, 0.0
    %875 = vadd.xlane.f32.xlu0 %v874
    %v876 = vpop.xlane.xlu0 %875
    %v877 = vmul.f32 %v873, 0.03125
    %v878 = vmul.f32 %v876, 0.03125
    %v879 = vmul.f32 %v867, %v867
    %v880 = vmul.f32 %v868, %v868
    %v881 = vsub.f32 %v877, %v879
    %v882 = vsub.f32 %v878, %v880
    %v883 = vadd.f32 %v881, 1e-05
    %v884 = vadd.f32 %v882, 1e-05
    %v885 = vrsqrt.pop %v883
    %v886 = vrsqrt.pop %v884
    %v887 = vsub.f32 %v835, %v867
    %v888 = vsub.f32 %v836, %v868
    %v889 = vmul.f32 %v885, %v856
    %v890 = vmul.f32 %v886, %v857
    %892 = vset.pattern.permute.xlu0 0
    %893 = vperm.xlu0 %892, %v889
    %v894 = vpop.permute.xlu0 %893
    %897 = vset.pattern.permute.xlu0 0
    %898 = vperm.xlu0 %897, %v890
    %v899 = vpop.permute.xlu0 %898
    %v901 = vmul.f32 %v887, %v894
    %v902 = vmul.f32 %v888, %v899
    %904 = vset.pattern.permute.xlu0 0
    %905 = vperm.xlu0 %904, %v859
    %v906 = vpop.permute.xlu0 %905
    %909 = vset.pattern.permute.xlu0 0
    %910 = vperm.xlu0 %909, %v860
    %v911 = vpop.permute.xlu0 %910
    %v913 = vadd.f32 %v901, %v906
    %v914 = vadd.f32 %v902, %v911
    %v915 = vtanh.pop %v913
    %v916 = vtanh.pop %v914
    %s917 = scalar_lea.vmem %s12, 48
    %918 = vst.msk [vmem:[%s917] sm:$0xff] %vm117, %v915
    %919 = vst.msk [vmem:[%s917 + $0x8] sm:$0x3] %vm119, %v916
    %s920 = scalar_lea.vmem %s4, 48
    %v921 = vld [vmem:[%s920] sm:$0xff]
    %v922 = vld [vmem:[%s920 + $0x8] sm:$0x3]
    %924 = vset.pattern.permute.xlu0 0
    %925 = vperm.xlu0 %924, %v921
    %v926 = vpop.permute.xlu0 %925
    %929 = vset.pattern.permute.xlu0 0
    %930 = vperm.xlu0 %929, %v922
    %v931 = vpop.permute.xlu0 %930
    %v933 = vlaneseq
    %v934 = vshrl.u32 %v933, 7
    %v935 = vsub.s32 0, %v934
    %v936 = vrot.slane %v915, %v935
    %v937 = vmul.f32 %v926, %v936
    %v938 = vmul.f32 %v931, %v936
    %939 = vset.pattern.permute.xlu0 1
    %940 = vperm.xlu0 %939, %v921
    %v941 = vpop.permute.xlu0 %940
    %943 = vset.pattern.permute.xlu0 1
    %944 = vperm.xlu0 %943, %v922
    %v945 = vpop.permute.xlu0 %944
    %v947 = vlaneseq
    %v948 = vshrl.u32 %v947, 7
    %v949 = vsub.s32 1, %v948
    %v950 = vrot.slane %v915, %v949
    %v951 = vmul.f32 %v941, %v950
    %v952 = vmul.f32 %v945, %v950
    %v953 = vadd.f32 %v937, %v951
    %v954 = vadd.f32 %v938, %v952
    %955 = vset.pattern.permute.xlu0 2
    %956 = vperm.xlu0 %955, %v921
    %v957 = vpop.permute.xlu0 %956
    %959 = vset.pattern.permute.xlu0 2
    %960 = vperm.xlu0 %959, %v922
    %v961 = vpop.permute.xlu0 %960
    %v963 = vlaneseq
    %v964 = vshrl.u32 %v963, 7
    %v965 = vsub.s32 2, %v964
    %v966 = vrot.slane %v915, %v965
    %v967 = vmul.f32 %v957, %v966
    %v968 = vmul.f32 %v961, %v966
    %v969 = vadd.f32 %v953, %v967
    %v970 = vadd.f32 %v954, %v968
    %971 = vset.pattern.permute.xlu0 3
    %972 = vperm.xlu0 %971, %v921
    %v973 = vpop.permute.xlu0 %972
    %975 = vset.pattern.permute.xlu0 3
    %976 = vperm.xlu0 %975, %v922
    %v977 = vpop.permute.xlu0 %976
    %v979 = vlaneseq
    %v980 = vshrl.u32 %v979, 7
    %v981 = vsub.s32 3, %v980
    %v982 = vrot.slane %v915, %v981
    %v983 = vmul.f32 %v973, %v982
    %v984 = vmul.f32 %v977, %v982
    %v985 = vadd.f32 %v969, %v983
    %v986 = vadd.f32 %v970, %v984
    %987 = vset.pattern.permute.xlu0 4
    %988 = vperm.xlu0 %987, %v921
    %v989 = vpop.permute.xlu0 %988
    %991 = vset.pattern.permute.xlu0 4
    %992 = vperm.xlu0 %991, %v922
    %v993 = vpop.permute.xlu0 %992
    %v995 = vlaneseq
    %v996 = vshrl.u32 %v995, 7
    %v997 = vsub.s32 4, %v996
    %v998 = vrot.slane %v915, %v997
    %v999 = vmul.f32 %v989, %v998
    %v1000 = vmul.f32 %v993, %v998
    %v1001 = vadd.f32 %v985, %v999
    %v1002 = vadd.f32 %v986, %v1000
    %1003 = vset.pattern.permute.xlu0 5
    %1004 = vperm.xlu0 %1003, %v921
    %v1005 = vpop.permute.xlu0 %1004
    %1007 = vset.pattern.permute.xlu0 5
    %1008 = vperm.xlu0 %1007, %v922
    %v1009 = vpop.permute.xlu0 %1008
    %v1011 = vlaneseq
    %v1012 = vshrl.u32 %v1011, 7
    %v1013 = vsub.s32 5, %v1012
    %v1014 = vrot.slane %v915, %v1013
    %v1015 = vmul.f32 %v1005, %v1014
    %v1016 = vmul.f32 %v1009, %v1014
    %v1017 = vadd.f32 %v1001, %v1015
    %v1018 = vadd.f32 %v1002, %v1016
    %1019 = vset.pattern.permute.xlu0 6
    %1020 = vperm.xlu0 %1019, %v921
    %v1021 = vpop.permute.xlu0 %1020
    %1023 = vset.pattern.permute.xlu0 6
    %1024 = vperm.xlu0 %1023, %v922
    %v1025 = vpop.permute.xlu0 %1024
    %v1027 = vlaneseq
    %v1028 = vshrl.u32 %v1027, 7
    %v1029 = vsub.s32 6, %v1028
    %v1030 = vrot.slane %v915, %v1029
    %v1031 = vmul.f32 %v1021, %v1030
    %v1032 = vmul.f32 %v1025, %v1030
    %v1033 = vadd.f32 %v1017, %v1031
    %v1034 = vadd.f32 %v1018, %v1032
    %1035 = vset.pattern.permute.xlu0 7
    %1036 = vperm.xlu0 %1035, %v921
    %v1037 = vpop.permute.xlu0 %1036
    %1039 = vset.pattern.permute.xlu0 7
    %1040 = vperm.xlu0 %1039, %v922
    %v1041 = vpop.permute.xlu0 %1040
    %v1043 = vlaneseq
    %v1044 = vshrl.u32 %v1043, 7
    %v1045 = vsub.s32 7, %v1044
    %v1046 = vrot.slane %v915, %v1045
    %v1047 = vmul.f32 %v1037, %v1046
    %v1048 = vmul.f32 %v1041, %v1046
    %v1049 = vadd.f32 %v1033, %v1047
    %v1050 = vadd.f32 %v1034, %v1048
    %1051 = vset.pattern.permute.xlu0 8
    %1052 = vperm.xlu0 %1051, %v921
    %v1053 = vpop.permute.xlu0 %1052
    %1055 = vset.pattern.permute.xlu0 8
    %1056 = vperm.xlu0 %1055, %v922
    %v1057 = vpop.permute.xlu0 %1056
    %v1059 = vlaneseq
    %v1060 = vshrl.u32 %v1059, 7
    %v1061 = vsub.s32 0, %v1060
    %v1062 = vrot.slane %v916, %v1061
    %v1063 = vmul.f32 %v1053, %v1062
    %v1064 = vmul.f32 %v1057, %v1062
    %v1065 = vadd.f32 %v1049, %v1063
    %v1066 = vadd.f32 %v1050, %v1064
    %1067 = vset.pattern.permute.xlu0 9
    %1068 = vperm.xlu0 %1067, %v921
    %v1069 = vpop.permute.xlu0 %1068
    %1071 = vset.pattern.permute.xlu0 9
    %1072 = vperm.xlu0 %1071, %v922
    %v1073 = vpop.permute.xlu0 %1072
    %v1075 = vlaneseq
    %v1076 = vshrl.u32 %v1075, 7
    %v1077 = vsub.s32 1, %v1076
    %v1078 = vrot.slane %v916, %v1077
    %v1079 = vmul.f32 %v1069, %v1078
    %v1080 = vmul.f32 %v1073, %v1078
    %v1081 = vadd.f32 %v1065, %v1079
    %v1082 = vadd.f32 %v1066, %v1080
    %s1083 = scalar_lea.vmem %s5, 64
    %v1084 = vld [vmem:[%s1083] sm:$0xff]
    %v1085 = vld [vmem:[%s1083 + $0x8] sm:$0x3]
    %1087 = vset.pattern.permute.xlu0 0
    %1088 = vperm.xlu0 %1087, %v1084
    %v1089 = vpop.permute.xlu0 %1088
    %1092 = vset.pattern.permute.xlu0 0
    %1093 = vperm.xlu0 %1092, %v1085
    %v1094 = vpop.permute.xlu0 %1093
    %v1096 = vadd.f32 %v1081, %v1089
    %v1097 = vadd.f32 %v1082, %v1094
    %s1098 = scalar_lea.vmem %s13, 64
    %1099 = vst.msk [vmem:[%s1098] sm:$0xff] %vm117, %v1096
    %1100 = vst.msk [vmem:[%s1098 + $0x8] sm:$0x3] %vm119, %v1097
    %s1101 = scalar_lea.vmem %s6, 64
    %v1102 = vld [vmem:[%s1101] sm:$0xff]
    %v1103 = vld [vmem:[%s1101 + $0x8] sm:$0x3]
    %s1104 = scalar_lea.vmem %s7, 64
    %v1105 = vld [vmem:[%s1104] sm:$0xff]
    %v1106 = vld [vmem:[%s1104 + $0x8] sm:$0x3]
    %v1107 = vsel %vm117, %v1081, 0.0
    %1108 = vadd.xlane.f32.xlu0 %v1107
    %v1109 = vpop.xlane.xlu0 %1108
    %v1110 = vsel %vm119, %v1082, 0.0
    %1111 = vadd.xlane.f32.xlu0 %v1110
    %v1112 = vpop.xlane.xlu0 %1111
    %v1113 = vmul.f32 %v1109, 0.03125
    %v1114 = vmul.f32 %v1112, 0.03125
    %v1115 = vmul.f32 %v1081, %v1081
    %v1116 = vmul.f32 %v1082, %v1082
    %v1117 = vsel %vm117, %v1115, 0.0
    %1118 = vadd.xlane.f32.xlu0 %v1117
    %v1119 = vpop.xlane.xlu0 %1118
    %v1120 = vsel %vm119, %v1116, 0.0
    %1121 = vadd.xlane.f32.xlu0 %v1120
    %v1122 = vpop.xlane.xlu0 %1121
    %v1123 = vmul.f32 %v1119, 0.03125
    %v1124 = vmul.f32 %v1122, 0.03125
    %v1125 = vmul.f32 %v1113, %v1113
    %v1126 = vmul.f32 %v1114, %v1114
    %v1127 = vsub.f32 %v1123, %v1125
    %v1128 = vsub.f32 %v1124, %v1126
    %v1129 = vadd.f32 %v1127, 1e-05
    %v1130 = vadd.f32 %v1128, 1e-05
    %v1131 = vrsqrt.pop %v1129
    %v1132 = vrsqrt.pop %v1130
    %v1133 = vsub.f32 %v1081, %v1113
    %v1134 = vsub.f32 %v1082, %v1114
    %v1135 = vmul.f32 %v1131, %v1102
    %v1136 = vmul.f32 %v1132, %v1103
    %1138 = vset.pattern.permute.xlu0 0
    %1139 = vperm.xlu0 %1138, %v1135
    %v1140 = vpop.permute.xlu0 %1139
    %1143 = vset.pattern.permute.xlu0 0
    %1144 = vperm.xlu0 %1143, %v1136
    %v1145 = vpop.permute.xlu0 %1144
    %v1147 = vmul.f32 %v1133, %v1140
    %v1148 = vmul.f32 %v1134, %v1145
    %1150 = vset.pattern.permute.xlu0 0
    %1151 = vperm.xlu0 %1150, %v1105
    %v1152 = vpop.permute.xlu0 %1151
    %1155 = vset.pattern.permute.xlu0 0
    %1156 = vperm.xlu0 %1155, %v1106
    %v1157 = vpop.permute.xlu0 %1156
    %v1159 = vadd.f32 %v1147, %v1152
    %v1160 = vadd.f32 %v1148, %v1157
    %v1161 = vtanh.pop %v1159
    %v1162 = vtanh.pop %v1160
    %s1163 = scalar_lea.vmem %s12, 64
    %1164 = vst.msk [vmem:[%s1163] sm:$0xff] %vm117, %v1161
    %1165 = vst.msk [vmem:[%s1163 + $0x8] sm:$0x3] %vm119, %v1162
    %s1166 = scalar_lea.vmem %s4, 64
    %v1167 = vld [vmem:[%s1166] sm:$0xff]
    %v1168 = vld [vmem:[%s1166 + $0x8] sm:$0x3]
    %1170 = vset.pattern.permute.xlu0 0
    %1171 = vperm.xlu0 %1170, %v1167
    %v1172 = vpop.permute.xlu0 %1171
    %1175 = vset.pattern.permute.xlu0 0
    %1176 = vperm.xlu0 %1175, %v1168
    %v1177 = vpop.permute.xlu0 %1176
    %v1179 = vlaneseq
    %v1180 = vshrl.u32 %v1179, 7
    %v1181 = vsub.s32 0, %v1180
    %v1182 = vrot.slane %v1161, %v1181
    %v1183 = vmul.f32 %v1172, %v1182
    %v1184 = vmul.f32 %v1177, %v1182
    %1185 = vset.pattern.permute.xlu0 1
    %1186 = vperm.xlu0 %1185, %v1167
    %v1187 = vpop.permute.xlu0 %1186
    %1189 = vset.pattern.permute.xlu0 1
    %1190 = vperm.xlu0 %1189, %v1168
    %v1191 = vpop.permute.xlu0 %1190
    %v1193 = vlaneseq
    %v1194 = vshrl.u32 %v1193, 7
    %v1195 = vsub.s32 1, %v1194
    %v1196 = vrot.slane %v1161, %v1195
    %v1197 = vmul.f32 %v1187, %v1196
    %v1198 = vmul.f32 %v1191, %v1196
    %v1199 = vadd.f32 %v1183, %v1197
    %v1200 = vadd.f32 %v1184, %v1198
    %1201 = vset.pattern.permute.xlu0 2
    %1202 = vperm.xlu0 %1201, %v1167
    %v1203 = vpop.permute.xlu0 %1202
    %1205 = vset.pattern.permute.xlu0 2
    %1206 = vperm.xlu0 %1205, %v1168
    %v1207 = vpop.permute.xlu0 %1206
    %v1209 = vlaneseq
    %v1210 = vshrl.u32 %v1209, 7
    %v1211 = vsub.s32 2, %v1210
    %v1212 = vrot.slane %v1161, %v1211
    %v1213 = vmul.f32 %v1203, %v1212
    %v1214 = vmul.f32 %v1207, %v1212
    %v1215 = vadd.f32 %v1199, %v1213
    %v1216 = vadd.f32 %v1200, %v1214
    %1217 = vset.pattern.permute.xlu0 3
    %1218 = vperm.xlu0 %1217, %v1167
    %v1219 = vpop.permute.xlu0 %1218
    %1221 = vset.pattern.permute.xlu0 3
    %1222 = vperm.xlu0 %1221, %v1168
    %v1223 = vpop.permute.xlu0 %1222
    %v1225 = vlaneseq
    %v1226 = vshrl.u32 %v1225, 7
    %v1227 = vsub.s32 3, %v1226
    %v1228 = vrot.slane %v1161, %v1227
    %v1229 = vmul.f32 %v1219, %v1228
    %v1230 = vmul.f32 %v1223, %v1228
    %v1231 = vadd.f32 %v1215, %v1229
    %v1232 = vadd.f32 %v1216, %v1230
    %1233 = vset.pattern.permute.xlu0 4
    %1234 = vperm.xlu0 %1233, %v1167
    %v1235 = vpop.permute.xlu0 %1234
    %1237 = vset.pattern.permute.xlu0 4
    %1238 = vperm.xlu0 %1237, %v1168
    %v1239 = vpop.permute.xlu0 %1238
    %v1241 = vlaneseq
    %v1242 = vshrl.u32 %v1241, 7
    %v1243 = vsub.s32 4, %v1242
    %v1244 = vrot.slane %v1161, %v1243
    %v1245 = vmul.f32 %v1235, %v1244
    %v1246 = vmul.f32 %v1239, %v1244
    %v1247 = vadd.f32 %v1231, %v1245
    %v1248 = vadd.f32 %v1232, %v1246
    %1249 = vset.pattern.permute.xlu0 5
    %1250 = vperm.xlu0 %1249, %v1167
    %v1251 = vpop.permute.xlu0 %1250
    %1253 = vset.pattern.permute.xlu0 5
    %1254 = vperm.xlu0 %1253, %v1168
    %v1255 = vpop.permute.xlu0 %1254
    %v1257 = vlaneseq
    %v1258 = vshrl.u32 %v1257, 7
    %v1259 = vsub.s32 5, %v1258
    %v1260 = vrot.slane %v1161, %v1259
    %v1261 = vmul.f32 %v1251, %v1260
    %v1262 = vmul.f32 %v1255, %v1260
    %v1263 = vadd.f32 %v1247, %v1261
    %v1264 = vadd.f32 %v1248, %v1262
    %1265 = vset.pattern.permute.xlu0 6
    %1266 = vperm.xlu0 %1265, %v1167
    %v1267 = vpop.permute.xlu0 %1266
    %1269 = vset.pattern.permute.xlu0 6
    %1270 = vperm.xlu0 %1269, %v1168
    %v1271 = vpop.permute.xlu0 %1270
    %v1273 = vlaneseq
    %v1274 = vshrl.u32 %v1273, 7
    %v1275 = vsub.s32 6, %v1274
    %v1276 = vrot.slane %v1161, %v1275
    %v1277 = vmul.f32 %v1267, %v1276
    %v1278 = vmul.f32 %v1271, %v1276
    %v1279 = vadd.f32 %v1263, %v1277
    %v1280 = vadd.f32 %v1264, %v1278
    %1281 = vset.pattern.permute.xlu0 7
    %1282 = vperm.xlu0 %1281, %v1167
    %v1283 = vpop.permute.xlu0 %1282
    %1285 = vset.pattern.permute.xlu0 7
    %1286 = vperm.xlu0 %1285, %v1168
    %v1287 = vpop.permute.xlu0 %1286
    %v1289 = vlaneseq
    %v1290 = vshrl.u32 %v1289, 7
    %v1291 = vsub.s32 7, %v1290
    %v1292 = vrot.slane %v1161, %v1291
    %v1293 = vmul.f32 %v1283, %v1292
    %v1294 = vmul.f32 %v1287, %v1292
    %v1295 = vadd.f32 %v1279, %v1293
    %v1296 = vadd.f32 %v1280, %v1294
    %1297 = vset.pattern.permute.xlu0 8
    %1298 = vperm.xlu0 %1297, %v1167
    %v1299 = vpop.permute.xlu0 %1298
    %1301 = vset.pattern.permute.xlu0 8
    %1302 = vperm.xlu0 %1301, %v1168
    %v1303 = vpop.permute.xlu0 %1302
    %v1305 = vlaneseq
    %v1306 = vshrl.u32 %v1305, 7
    %v1307 = vsub.s32 0, %v1306
    %v1308 = vrot.slane %v1162, %v1307
    %v1309 = vmul.f32 %v1299, %v1308
    %v1310 = vmul.f32 %v1303, %v1308
    %v1311 = vadd.f32 %v1295, %v1309
    %v1312 = vadd.f32 %v1296, %v1310
    %1313 = vset.pattern.permute.xlu0 9
    %1314 = vperm.xlu0 %1313, %v1167
    %v1315 = vpop.permute.xlu0 %1314
    %1317 = vset.pattern.permute.xlu0 9
    %1318 = vperm.xlu0 %1317, %v1168
    %v1319 = vpop.permute.xlu0 %1318
    %v1321 = vlaneseq
    %v1322 = vshrl.u32 %v1321, 7
    %v1323 = vsub.s32 1, %v1322
    %v1324 = vrot.slane %v1162, %v1323
    %v1325 = vmul.f32 %v1315, %v1324
    %v1326 = vmul.f32 %v1319, %v1324
    %v1327 = vadd.f32 %v1311, %v1325
    %v1328 = vadd.f32 %v1312, %v1326
    %s1329 = scalar_lea.vmem %s5, 80
    %v1330 = vld [vmem:[%s1329] sm:$0xff]
    %v1331 = vld [vmem:[%s1329 + $0x8] sm:$0x3]
    %1333 = vset.pattern.permute.xlu0 0
    %1334 = vperm.xlu0 %1333, %v1330
    %v1335 = vpop.permute.xlu0 %1334
    %1338 = vset.pattern.permute.xlu0 0
    %1339 = vperm.xlu0 %1338, %v1331
    %v1340 = vpop.permute.xlu0 %1339
    %v1342 = vadd.f32 %v1327, %v1335
    %v1343 = vadd.f32 %v1328, %v1340
    %s1344 = scalar_lea.vmem %s13, 80
    %1345 = vst.msk [vmem:[%s1344] sm:$0xff] %vm117, %v1342
    %1346 = vst.msk [vmem:[%s1344 + $0x8] sm:$0x3] %vm119, %v1343
    %s1347 = scalar_lea.vmem %s6, 80
    %v1348 = vld [vmem:[%s1347] sm:$0xff]
    %v1349 = vld [vmem:[%s1347 + $0x8] sm:$0x3]
    %s1350 = scalar_lea.vmem %s7, 80
    %v1351 = vld [vmem:[%s1350] sm:$0xff]
    %v1352 = vld [vmem:[%s1350 + $0x8] sm:$0x3]
    %v1353 = vsel %vm117, %v1327, 0.0
    %1354 = vadd.xlane.f32.xlu0 %v1353
    %v1355 = vpop.xlane.xlu0 %1354
    %v1356 = vsel %vm119, %v1328, 0.0
    %1357 = vadd.xlane.f32.xlu0 %v1356
    %v1358 = vpop.xlane.xlu0 %1357
    %v1359 = vmul.f32 %v1355, 0.03125
    %v1360 = vmul.f32 %v1358, 0.03125
    %v1361 = vmul.f32 %v1327, %v1327
    %v1362 = vmul.f32 %v1328, %v1328
    %v1363 = vsel %vm117, %v1361, 0.0
    %1364 = vadd.xlane.f32.xlu0 %v1363
    %v1365 = vpop.xlane.xlu0 %1364
    %v1366 = vsel %vm119, %v1362, 0.0
    %1367 = vadd.xlane.f32.xlu0 %v1366
    %v1368 = vpop.xlane.xlu0 %1367
    %v1369 = vmul.f32 %v1365, 0.03125
    %v1370 = vmul.f32 %v1368, 0.03125
    %v1371 = vmul.f32 %v1359, %v1359
    %v1372 = vmul.f32 %v1360, %v1360
    %v1373 = vsub.f32 %v1369, %v1371
    %v1374 = vsub.f32 %v1370, %v1372
    %v1375 = vadd.f32 %v1373, 1e-05
    %v1376 = vadd.f32 %v1374, 1e-05
    %v1377 = vrsqrt.pop %v1375
    %v1378 = vrsqrt.pop %v1376
    %v1379 = vsub.f32 %v1327, %v1359
    %v1380 = vsub.f32 %v1328, %v1360
    %v1381 = vmul.f32 %v1377, %v1348
    %v1382 = vmul.f32 %v1378, %v1349
    %1384 = vset.pattern.permute.xlu0 0
    %1385 = vperm.xlu0 %1384, %v1381
    %v1386 = vpop.permute.xlu0 %1385
    %1389 = vset.pattern.permute.xlu0 0
    %1390 = vperm.xlu0 %1389, %v1382
    %v1391 = vpop.permute.xlu0 %1390
    %v1393 = vmul.f32 %v1379, %v1386
    %v1394 = vmul.f32 %v1380, %v1391
    %1396 = vset.pattern.permute.xlu0 0
    %1397 = vperm.xlu0 %1396, %v1351
    %v1398 = vpop.permute.xlu0 %1397
    %1401 = vset.pattern.permute.xlu0 0
    %1402 = vperm.xlu0 %1401, %v1352
    %v1403 = vpop.permute.xlu0 %1402
    %v1405 = vadd.f32 %v1393, %v1398
    %v1406 = vadd.f32 %v1394, %v1403
    %v1407 = vtanh.pop %v1405
    %v1408 = vtanh.pop %v1406
    %s1409 = scalar_lea.vmem %s12, 80
    %1410 = vst.msk [vmem:[%s1409] sm:$0xff] %vm117, %v1407
    %1411 = vst.msk [vmem:[%s1409 + $0x8] sm:$0x3] %vm119, %v1408
    %s1412 = scalar_lea.vmem %s4, 80
    %v1413 = vld [vmem:[%s1412] sm:$0xff]
    %v1414 = vld [vmem:[%s1412 + $0x8] sm:$0x3]
    %1416 = vset.pattern.permute.xlu0 0
    %1417 = vperm.xlu0 %1416, %v1413
    %v1418 = vpop.permute.xlu0 %1417
    %1421 = vset.pattern.permute.xlu0 0
    %1422 = vperm.xlu0 %1421, %v1414
    %v1423 = vpop.permute.xlu0 %1422
    %v1425 = vlaneseq
    %v1426 = vshrl.u32 %v1425, 7
    %v1427 = vsub.s32 0, %v1426
    %v1428 = vrot.slane %v1407, %v1427
    %v1429 = vmul.f32 %v1418, %v1428
    %v1430 = vmul.f32 %v1423, %v1428
    %1431 = vset.pattern.permute.xlu0 1
    %1432 = vperm.xlu0 %1431, %v1413
    %v1433 = vpop.permute.xlu0 %1432
    %1435 = vset.pattern.permute.xlu0 1
    %1436 = vperm.xlu0 %1435, %v1414
    %v1437 = vpop.permute.xlu0 %1436
    %v1439 = vlaneseq
    %v1440 = vshrl.u32 %v1439, 7
    %v1441 = vsub.s32 1, %v1440
    %v1442 = vrot.slane %v1407, %v1441
    %v1443 = vmul.f32 %v1433, %v1442
    %v1444 = vmul.f32 %v1437, %v1442
    %v1445 = vadd.f32 %v1429, %v1443
    %v1446 = vadd.f32 %v1430, %v1444
    %1447 = vset.pattern.permute.xlu0 2
    %1448 = vperm.xlu0 %1447, %v1413
    %v1449 = vpop.permute.xlu0 %1448
    %1451 = vset.pattern.permute.xlu0 2
    %1452 = vperm.xlu0 %1451, %v1414
    %v1453 = vpop.permute.xlu0 %1452
    %v1455 = vlaneseq
    %v1456 = vshrl.u32 %v1455, 7
    %v1457 = vsub.s32 2, %v1456
    %v1458 = vrot.slane %v1407, %v1457
    %v1459 = vmul.f32 %v1449, %v1458
    %v1460 = vmul.f32 %v1453, %v1458
    %v1461 = vadd.f32 %v1445, %v1459
    %v1462 = vadd.f32 %v1446, %v1460
    %1463 = vset.pattern.permute.xlu0 3
    %1464 = vperm.xlu0 %1463, %v1413
    %v1465 = vpop.permute.xlu0 %1464
    %1467 = vset.pattern.permute.xlu0 3
    %1468 = vperm.xlu0 %1467, %v1414
    %v1469 = vpop.permute.xlu0 %1468
    %v1471 = vlaneseq
    %v1472 = vshrl.u32 %v1471, 7
    %v1473 = vsub.s32 3, %v1472
    %v1474 = vrot.slane %v1407, %v1473
    %v1475 = vmul.f32 %v1465, %v1474
    %v1476 = vmul.f32 %v1469, %v1474
    %v1477 = vadd.f32 %v1461, %v1475
    %v1478 = vadd.f32 %v1462, %v1476
    %1479 = vset.pattern.permute.xlu0 4
    %1480 = vperm.xlu0 %1479, %v1413
    %v1481 = vpop.permute.xlu0 %1480
    %1483 = vset.pattern.permute.xlu0 4
    %1484 = vperm.xlu0 %1483, %v1414
    %v1485 = vpop.permute.xlu0 %1484
    %v1487 = vlaneseq
    %v1488 = vshrl.u32 %v1487, 7
    %v1489 = vsub.s32 4, %v1488
    %v1490 = vrot.slane %v1407, %v1489
    %v1491 = vmul.f32 %v1481, %v1490
    %v1492 = vmul.f32 %v1485, %v1490
    %v1493 = vadd.f32 %v1477, %v1491
    %v1494 = vadd.f32 %v1478, %v1492
    %1495 = vset.pattern.permute.xlu0 5
    %1496 = vperm.xlu0 %1495, %v1413
    %v1497 = vpop.permute.xlu0 %1496
    %1499 = vset.pattern.permute.xlu0 5
    %1500 = vperm.xlu0 %1499, %v1414
    %v1501 = vpop.permute.xlu0 %1500
    %v1503 = vlaneseq
    %v1504 = vshrl.u32 %v1503, 7
    %v1505 = vsub.s32 5, %v1504
    %v1506 = vrot.slane %v1407, %v1505
    %v1507 = vmul.f32 %v1497, %v1506
    %v1508 = vmul.f32 %v1501, %v1506
    %v1509 = vadd.f32 %v1493, %v1507
    %v1510 = vadd.f32 %v1494, %v1508
    %1511 = vset.pattern.permute.xlu0 6
    %1512 = vperm.xlu0 %1511, %v1413
    %v1513 = vpop.permute.xlu0 %1512
    %1515 = vset.pattern.permute.xlu0 6
    %1516 = vperm.xlu0 %1515, %v1414
    %v1517 = vpop.permute.xlu0 %1516
    %v1519 = vlaneseq
    %v1520 = vshrl.u32 %v1519, 7
    %v1521 = vsub.s32 6, %v1520
    %v1522 = vrot.slane %v1407, %v1521
    %v1523 = vmul.f32 %v1513, %v1522
    %v1524 = vmul.f32 %v1517, %v1522
    %v1525 = vadd.f32 %v1509, %v1523
    %v1526 = vadd.f32 %v1510, %v1524
    %1527 = vset.pattern.permute.xlu0 7
    %1528 = vperm.xlu0 %1527, %v1413
    %v1529 = vpop.permute.xlu0 %1528
    %1531 = vset.pattern.permute.xlu0 7
    %1532 = vperm.xlu0 %1531, %v1414
    %v1533 = vpop.permute.xlu0 %1532
    %v1535 = vlaneseq
    %v1536 = vshrl.u32 %v1535, 7
    %v1537 = vsub.s32 7, %v1536
    %v1538 = vrot.slane %v1407, %v1537
    %v1539 = vmul.f32 %v1529, %v1538
    %v1540 = vmul.f32 %v1533, %v1538
    %v1541 = vadd.f32 %v1525, %v1539
    %v1542 = vadd.f32 %v1526, %v1540
    %1543 = vset.pattern.permute.xlu0 8
    %1544 = vperm.xlu0 %1543, %v1413
    %v1545 = vpop.permute.xlu0 %1544
    %1547 = vset.pattern.permute.xlu0 8
    %1548 = vperm.xlu0 %1547, %v1414
    %v1549 = vpop.permute.xlu0 %1548
    %v1551 = vlaneseq
    %v1552 = vshrl.u32 %v1551, 7
    %v1553 = vsub.s32 0, %v1552
    %v1554 = vrot.slane %v1408, %v1553
    %v1555 = vmul.f32 %v1545, %v1554
    %v1556 = vmul.f32 %v1549, %v1554
    %v1557 = vadd.f32 %v1541, %v1555
    %v1558 = vadd.f32 %v1542, %v1556
    %1559 = vset.pattern.permute.xlu0 9
    %1560 = vperm.xlu0 %1559, %v1413
    %v1561 = vpop.permute.xlu0 %1560
    %1563 = vset.pattern.permute.xlu0 9
    %1564 = vperm.xlu0 %1563, %v1414
    %v1565 = vpop.permute.xlu0 %1564
    %v1567 = vlaneseq
    %v1568 = vshrl.u32 %v1567, 7
    %v1569 = vsub.s32 1, %v1568
    %v1570 = vrot.slane %v1408, %v1569
    %v1571 = vmul.f32 %v1561, %v1570
    %v1572 = vmul.f32 %v1565, %v1570
    %v1573 = vadd.f32 %v1557, %v1571
    %v1574 = vadd.f32 %v1558, %v1572
    %s1575 = scalar_lea.vmem %s5, 96
    %v1576 = vld [vmem:[%s1575] sm:$0xff]
    %v1577 = vld [vmem:[%s1575 + $0x8] sm:$0x3]
    %1579 = vset.pattern.permute.xlu0 0
    %1580 = vperm.xlu0 %1579, %v1576
    %v1581 = vpop.permute.xlu0 %1580
    %1584 = vset.pattern.permute.xlu0 0
    %1585 = vperm.xlu0 %1584, %v1577
    %v1586 = vpop.permute.xlu0 %1585
    %v1588 = vadd.f32 %v1573, %v1581
    %v1589 = vadd.f32 %v1574, %v1586
    %s1590 = scalar_lea.vmem %s13, 96
    %1591 = vst.msk [vmem:[%s1590] sm:$0xff] %vm117, %v1588
    %1592 = vst.msk [vmem:[%s1590 + $0x8] sm:$0x3] %vm119, %v1589
    %s1593 = scalar_lea.vmem %s6, 96
    %v1594 = vld [vmem:[%s1593] sm:$0xff]
    %v1595 = vld [vmem:[%s1593 + $0x8] sm:$0x3]
    %s1596 = scalar_lea.vmem %s7, 96
    %v1597 = vld [vmem:[%s1596] sm:$0xff]
    %v1598 = vld [vmem:[%s1596 + $0x8] sm:$0x3]
    %v1599 = vsel %vm117, %v1573, 0.0
    %1600 = vadd.xlane.f32.xlu0 %v1599
    %v1601 = vpop.xlane.xlu0 %1600
    %v1602 = vsel %vm119, %v1574, 0.0
    %1603 = vadd.xlane.f32.xlu0 %v1602
    %v1604 = vpop.xlane.xlu0 %1603
    %v1605 = vmul.f32 %v1601, 0.03125
    %v1606 = vmul.f32 %v1604, 0.03125
    %v1607 = vmul.f32 %v1573, %v1573
    %v1608 = vmul.f32 %v1574, %v1574
    %v1609 = vsel %vm117, %v1607, 0.0
    %1610 = vadd.xlane.f32.xlu0 %v1609
    %v1611 = vpop.xlane.xlu0 %1610
    %v1612 = vsel %vm119, %v1608, 0.0
    %1613 = vadd.xlane.f32.xlu0 %v1612
    %v1614 = vpop.xlane.xlu0 %1613
    %v1615 = vmul.f32 %v1611, 0.03125
    %v1616 = vmul.f32 %v1614, 0.03125
    %v1617 = vmul.f32 %v1605, %v1605
    %v1618 = vmul.f32 %v1606, %v1606
    %v1619 = vsub.f32 %v1615, %v1617
    %v1620 = vsub.f32 %v1616, %v1618
    %v1621 = vadd.f32 %v1619, 1e-05
    %v1622 = vadd.f32 %v1620, 1e-05
    %v1623 = vrsqrt.pop %v1621
    %v1624 = vrsqrt.pop %v1622
    %v1625 = vsub.f32 %v1573, %v1605
    %v1626 = vsub.f32 %v1574, %v1606
    %v1627 = vmul.f32 %v1623, %v1594
    %v1628 = vmul.f32 %v1624, %v1595
    %1630 = vset.pattern.permute.xlu0 0
    %1631 = vperm.xlu0 %1630, %v1627
    %v1632 = vpop.permute.xlu0 %1631
    %1635 = vset.pattern.permute.xlu0 0
    %1636 = vperm.xlu0 %1635, %v1628
    %v1637 = vpop.permute.xlu0 %1636
    %v1639 = vmul.f32 %v1625, %v1632
    %v1640 = vmul.f32 %v1626, %v1637
    %1642 = vset.pattern.permute.xlu0 0
    %1643 = vperm.xlu0 %1642, %v1597
    %v1644 = vpop.permute.xlu0 %1643
    %1647 = vset.pattern.permute.xlu0 0
    %1648 = vperm.xlu0 %1647, %v1598
    %v1649 = vpop.permute.xlu0 %1648
    %v1651 = vadd.f32 %v1639, %v1644
    %v1652 = vadd.f32 %v1640, %v1649
    %v1653 = vtanh.pop %v1651
    %v1654 = vtanh.pop %v1652
    %s1655 = scalar_lea.vmem %s12, 96
    %1656 = vst.msk [vmem:[%s1655] sm:$0xff] %vm117, %v1653
    %1657 = vst.msk [vmem:[%s1655 + $0x8] sm:$0x3] %vm119, %v1654
    %s1658 = scalar_lea.vmem %s4, 96
    %v1659 = vld [vmem:[%s1658] sm:$0xff]
    %v1660 = vld [vmem:[%s1658 + $0x8] sm:$0x3]
    %1662 = vset.pattern.permute.xlu0 0
    %1663 = vperm.xlu0 %1662, %v1659
    %v1664 = vpop.permute.xlu0 %1663
    %1667 = vset.pattern.permute.xlu0 0
    %1668 = vperm.xlu0 %1667, %v1660
    %v1669 = vpop.permute.xlu0 %1668
    %v1671 = vlaneseq
    %v1672 = vshrl.u32 %v1671, 7
    %v1673 = vsub.s32 0, %v1672
    %v1674 = vrot.slane %v1653, %v1673
    %v1675 = vmul.f32 %v1664, %v1674
    %v1676 = vmul.f32 %v1669, %v1674
    %1677 = vset.pattern.permute.xlu0 1
    %1678 = vperm.xlu0 %1677, %v1659
    %v1679 = vpop.permute.xlu0 %1678
    %1681 = vset.pattern.permute.xlu0 1
    %1682 = vperm.xlu0 %1681, %v1660
    %v1683 = vpop.permute.xlu0 %1682
    %v1685 = vlaneseq
    %v1686 = vshrl.u32 %v1685, 7
    %v1687 = vsub.s32 1, %v1686
    %v1688 = vrot.slane %v1653, %v1687
    %v1689 = vmul.f32 %v1679, %v1688
    %v1690 = vmul.f32 %v1683, %v1688
    %v1691 = vadd.f32 %v1675, %v1689
    %v1692 = vadd.f32 %v1676, %v1690
    %1693 = vset.pattern.permute.xlu0 2
    %1694 = vperm.xlu0 %1693, %v1659
    %v1695 = vpop.permute.xlu0 %1694
    %1697 = vset.pattern.permute.xlu0 2
    %1698 = vperm.xlu0 %1697, %v1660
    %v1699 = vpop.permute.xlu0 %1698
    %v1701 = vlaneseq
    %v1702 = vshrl.u32 %v1701, 7
    %v1703 = vsub.s32 2, %v1702
    %v1704 = vrot.slane %v1653, %v1703
    %v1705 = vmul.f32 %v1695, %v1704
    %v1706 = vmul.f32 %v1699, %v1704
    %v1707 = vadd.f32 %v1691, %v1705
    %v1708 = vadd.f32 %v1692, %v1706
    %1709 = vset.pattern.permute.xlu0 3
    %1710 = vperm.xlu0 %1709, %v1659
    %v1711 = vpop.permute.xlu0 %1710
    %1713 = vset.pattern.permute.xlu0 3
    %1714 = vperm.xlu0 %1713, %v1660
    %v1715 = vpop.permute.xlu0 %1714
    %v1717 = vlaneseq
    %v1718 = vshrl.u32 %v1717, 7
    %v1719 = vsub.s32 3, %v1718
    %v1720 = vrot.slane %v1653, %v1719
    %v1721 = vmul.f32 %v1711, %v1720
    %v1722 = vmul.f32 %v1715, %v1720
    %v1723 = vadd.f32 %v1707, %v1721
    %v1724 = vadd.f32 %v1708, %v1722
    %1725 = vset.pattern.permute.xlu0 4
    %1726 = vperm.xlu0 %1725, %v1659
    %v1727 = vpop.permute.xlu0 %1726
    %1729 = vset.pattern.permute.xlu0 4
    %1730 = vperm.xlu0 %1729, %v1660
    %v1731 = vpop.permute.xlu0 %1730
    %v1733 = vlaneseq
    %v1734 = vshrl.u32 %v1733, 7
    %v1735 = vsub.s32 4, %v1734
    %v1736 = vrot.slane %v1653, %v1735
    %v1737 = vmul.f32 %v1727, %v1736
    %v1738 = vmul.f32 %v1731, %v1736
    %v1739 = vadd.f32 %v1723, %v1737
    %v1740 = vadd.f32 %v1724, %v1738
    %1741 = vset.pattern.permute.xlu0 5
    %1742 = vperm.xlu0 %1741, %v1659
    %v1743 = vpop.permute.xlu0 %1742
    %1745 = vset.pattern.permute.xlu0 5
    %1746 = vperm.xlu0 %1745, %v1660
    %v1747 = vpop.permute.xlu0 %1746
    %v1749 = vlaneseq
    %v1750 = vshrl.u32 %v1749, 7
    %v1751 = vsub.s32 5, %v1750
    %v1752 = vrot.slane %v1653, %v1751
    %v1753 = vmul.f32 %v1743, %v1752
    %v1754 = vmul.f32 %v1747, %v1752
    %v1755 = vadd.f32 %v1739, %v1753
    %v1756 = vadd.f32 %v1740, %v1754
    %1757 = vset.pattern.permute.xlu0 6
    %1758 = vperm.xlu0 %1757, %v1659
    %v1759 = vpop.permute.xlu0 %1758
    %1761 = vset.pattern.permute.xlu0 6
    %1762 = vperm.xlu0 %1761, %v1660
    %v1763 = vpop.permute.xlu0 %1762
    %v1765 = vlaneseq
    %v1766 = vshrl.u32 %v1765, 7
    %v1767 = vsub.s32 6, %v1766
    %v1768 = vrot.slane %v1653, %v1767
    %v1769 = vmul.f32 %v1759, %v1768
    %v1770 = vmul.f32 %v1763, %v1768
    %v1771 = vadd.f32 %v1755, %v1769
    %v1772 = vadd.f32 %v1756, %v1770
    %1773 = vset.pattern.permute.xlu0 7
    %1774 = vperm.xlu0 %1773, %v1659
    %v1775 = vpop.permute.xlu0 %1774
    %1777 = vset.pattern.permute.xlu0 7
    %1778 = vperm.xlu0 %1777, %v1660
    %v1779 = vpop.permute.xlu0 %1778
    %v1781 = vlaneseq
    %v1782 = vshrl.u32 %v1781, 7
    %v1783 = vsub.s32 7, %v1782
    %v1784 = vrot.slane %v1653, %v1783
    %v1785 = vmul.f32 %v1775, %v1784
    %v1786 = vmul.f32 %v1779, %v1784
    %v1787 = vadd.f32 %v1771, %v1785
    %v1788 = vadd.f32 %v1772, %v1786
    %1789 = vset.pattern.permute.xlu0 8
    %1790 = vperm.xlu0 %1789, %v1659
    %v1791 = vpop.permute.xlu0 %1790
    %1793 = vset.pattern.permute.xlu0 8
    %1794 = vperm.xlu0 %1793, %v1660
    %v1795 = vpop.permute.xlu0 %1794
    %v1797 = vlaneseq
    %v1798 = vshrl.u32 %v1797, 7
    %v1799 = vsub.s32 0, %v1798
    %v1800 = vrot.slane %v1654, %v1799
    %v1801 = vmul.f32 %v1791, %v1800
    %v1802 = vmul.f32 %v1795, %v1800
    %v1803 = vadd.f32 %v1787, %v1801
    %v1804 = vadd.f32 %v1788, %v1802
    %1805 = vset.pattern.permute.xlu0 9
    %1806 = vperm.xlu0 %1805, %v1659
    %v1807 = vpop.permute.xlu0 %1806
    %1809 = vset.pattern.permute.xlu0 9
    %1810 = vperm.xlu0 %1809, %v1660
    %v1811 = vpop.permute.xlu0 %1810
    %v1813 = vlaneseq
    %v1814 = vshrl.u32 %v1813, 7
    %v1815 = vsub.s32 1, %v1814
    %v1816 = vrot.slane %v1654, %v1815
    %v1817 = vmul.f32 %v1807, %v1816
    %v1818 = vmul.f32 %v1811, %v1816
    %v1819 = vadd.f32 %v1803, %v1817
    %v1820 = vadd.f32 %v1804, %v1818
    %s1821 = scalar_lea.vmem %s5, 112
    %v1822 = vld [vmem:[%s1821] sm:$0xff]
    %v1823 = vld [vmem:[%s1821 + $0x8] sm:$0x3]
    %1825 = vset.pattern.permute.xlu0 0
    %1826 = vperm.xlu0 %1825, %v1822
    %v1827 = vpop.permute.xlu0 %1826
    %1830 = vset.pattern.permute.xlu0 0
    %1831 = vperm.xlu0 %1830, %v1823
    %v1832 = vpop.permute.xlu0 %1831
    %v1834 = vadd.f32 %v1819, %v1827
    %v1835 = vadd.f32 %v1820, %v1832
    %s1836 = scalar_lea.vmem %s13, 112
    %1837 = vst.msk [vmem:[%s1836] sm:$0xff] %vm117, %v1834
    %1838 = vst.msk [vmem:[%s1836 + $0x8] sm:$0x3] %vm119, %v1835
    %s1839 = scalar_lea.vmem %s6, 112
    %v1840 = vld [vmem:[%s1839] sm:$0xff]
    %v1841 = vld [vmem:[%s1839 + $0x8] sm:$0x3]
    %s1842 = scalar_lea.vmem %s7, 112
    %v1843 = vld [vmem:[%s1842] sm:$0xff]
    %v1844 = vld [vmem:[%s1842 + $0x8] sm:$0x3]
    %v1845 = vsel %vm117, %v1819, 0.0
    %1846 = vadd.xlane.f32.xlu0 %v1845
    %v1847 = vpop.xlane.xlu0 %1846
    %v1848 = vsel %vm119, %v1820, 0.0
    %1849 = vadd.xlane.f32.xlu0 %v1848
    %v1850 = vpop.xlane.xlu0 %1849
    %v1851 = vmul.f32 %v1847, 0.03125
    %v1852 = vmul.f32 %v1850, 0.03125
    %v1853 = vmul.f32 %v1819, %v1819
    %v1854 = vmul.f32 %v1820, %v1820
    %v1855 = vsel %vm117, %v1853, 0.0
    %1856 = vadd.xlane.f32.xlu0 %v1855
    %v1857 = vpop.xlane.xlu0 %1856
    %v1858 = vsel %vm119, %v1854, 0.0
    %1859 = vadd.xlane.f32.xlu0 %v1858
    %v1860 = vpop.xlane.xlu0 %1859
    %v1861 = vmul.f32 %v1857, 0.03125
    %v1862 = vmul.f32 %v1860, 0.03125
    %v1863 = vmul.f32 %v1851, %v1851
    %v1864 = vmul.f32 %v1852, %v1852
    %v1865 = vsub.f32 %v1861, %v1863
    %v1866 = vsub.f32 %v1862, %v1864
    %v1867 = vadd.f32 %v1865, 1e-05
    %v1868 = vadd.f32 %v1866, 1e-05
    %v1869 = vrsqrt.pop %v1867
    %v1870 = vrsqrt.pop %v1868
    %v1871 = vsub.f32 %v1819, %v1851
    %v1872 = vsub.f32 %v1820, %v1852
    %v1873 = vmul.f32 %v1869, %v1840
    %v1874 = vmul.f32 %v1870, %v1841
    %1876 = vset.pattern.permute.xlu0 0
    %1877 = vperm.xlu0 %1876, %v1873
    %v1878 = vpop.permute.xlu0 %1877
    %1881 = vset.pattern.permute.xlu0 0
    %1882 = vperm.xlu0 %1881, %v1874
    %v1883 = vpop.permute.xlu0 %1882
    %v1885 = vmul.f32 %v1871, %v1878
    %v1886 = vmul.f32 %v1872, %v1883
    %1888 = vset.pattern.permute.xlu0 0
    %1889 = vperm.xlu0 %1888, %v1843
    %v1890 = vpop.permute.xlu0 %1889
    %1893 = vset.pattern.permute.xlu0 0
    %1894 = vperm.xlu0 %1893, %v1844
    %v1895 = vpop.permute.xlu0 %1894
    %v1897 = vadd.f32 %v1885, %v1890
    %v1898 = vadd.f32 %v1886, %v1895
    %v1899 = vtanh.pop %v1897
    %v1900 = vtanh.pop %v1898
    %s1901 = scalar_lea.vmem %s12, 112
    %1902 = vst.msk [vmem:[%s1901] sm:$0xff] %vm117, %v1899
    %1903 = vst.msk [vmem:[%s1901 + $0x8] sm:$0x3] %vm119, %v1900
    %v1904 = vld [vmem:[%s8] sm:$0xff]
    %v1905 = vld [vmem:[%s8 + $0x8] sm:$0x3]
    %1907 = vset.pattern.permute.xlu0 0
    %1908 = vperm.xlu0 %1907, %v1904
    %v1909 = vpop.permute.xlu0 %1908
    %1912 = vset.pattern.permute.xlu0 0
    %1913 = vperm.xlu0 %1912, %v1905
    %v1914 = vpop.permute.xlu0 %1913
    %v1916 = vmul.f32 %v1909, %v1899
    %v1917 = vmul.f32 %v1914, %v1900
    %v1918 = vsel %vm117, %v1916, 0.0
    %v1919 = vsel %vm119, %v1917, 0.0
    %v1920 = vadd.f32 %v1918, %v1919
    %v1921 = vrot.slane %v1920, 4
    %v1922 = vadd.f32 %v1920, %v1921
    %v1923 = vrot.slane %v1922, 2
    %v1924 = vadd.f32 %v1922, %v1923
    %v1925 = vrot.slane %v1924, 1
    %v1926 = vadd.f32 %v1924, %v1925
    %v1927 = vld [vmem:[#allocation4] sm:$0x1]
    %1929 = vset.pattern.permute.xlu0 0
    %1930 = vperm.xlu0 %1929, %v1927
    %v1931 = vpop.permute.xlu0 %1930
    %v1933 = vlaneseq
    %v1934 = vshrl.u32 %v1933, 7
    %v1935 = vsub.s32 0, %v1934
    %v1936 = vrot.slane %v1931, %v1935
    %v1937 = vadd.f32 %v1926, %v1936
    %1938 = vst.msk [vmem:[#allocation5] sm:$0x1] %vm50, %v1937
    // Predicated region
    $region42: #{net_forward.1} parent=1 // pred_check
      _
    $region43: #{net_forward.1} parent=1 // pred_check_branch
      %1940 = sbr.rel (0) target = $region45
    $region44: #{net_forward.1} parent=1 // pred_region
      %s1942 = ssub.s32 16, 16
      %1943 = vsyncadd [#allocation6], %s1942
      %s1945 = sshll.u32 [#allocation5], 4
      %s1946 = int_to_ptr.vmem [resolvable:$true] %s1945
      %1948 = dma.vmem_to_hbm [thread:$0]  %s1946, 16, %s10, [#allocation6]
    $region45: #{net_forward.1} parent=1 // pred_fallthru
      _
    // Predicated region
    $region46: #{net_forward.1} parent=1 // pred_check
      _
    $region47: #{net_forward.1} parent=1 // pred_check_branch
      %1950 = sbr.rel (0) target = $region49
    $region48: #{net_forward.1} parent=1 // pred_region
      %s1952 = ssub.s32 16, 16
      %1953 = vsyncadd [#allocation8], %s1952
      %s1955 = sshll.u32 [#allocation7], 4
      %s1956 = int_to_ptr.vmem [resolvable:$true] %s1955
      %1958 = dma.vmem_to_hbm [thread:$0]  %s1956, 16, %s11, [#allocation8]
    $region49: #{net_forward.1} parent=1 // pred_fallthru
      _
    // Predicated region
    $region50: #{net_forward.1} parent=1 // pred_check
      _
    $region51: #{net_forward.1} parent=1 // pred_check_branch
      %1960 = sbr.rel (0) target = $region53
    $region52: #{net_forward.1} parent=1 // pred_region
      _
    $region53: #{net_forward.1} parent=1 // pred_fallthru
      _
    // Predicated region
    $region54: #{net_forward.1} parent=1 // pred_check
      _
    $region55: #{net_forward.1} parent=1 // pred_check_branch
      %1962 = sbr.rel (0) target = $region57
    $region56: #{net_forward.1} parent=1 // pred_region
      _
    $region57: #{net_forward.1} parent=1 // pred_fallthru
      _
    // Predicated region
    $region58: #{net_forward.1} parent=1 // pred_check
      _
    $region59: #{net_forward.1} parent=1 // pred_check_branch
      %1964 = sbr.rel (0) target = $region61
    $region60: #{net_forward.1} parent=1 // pred_region
      %1965 = dma.done [#allocation6], 16
    $region61: #{net_forward.1} parent=1 // pred_fallthru
      _
    // Predicated region
    $region62: #{net_forward.1} parent=1 // pred_check
      _
    $region63: #{net_forward.1} parent=1 // pred_check_branch
      %1967 = sbr.rel (0) target = $region65
    $region64: #{net_forward.1} parent=1 // pred_region
      %1968 = dma.done [#allocation8], 16
    $region65: #{net_forward.1} parent=1 // pred_fallthru
      _
    // Predicated region
    $region66: #{net_forward.1} parent=1 // pred_check
      _
    $region67: #{net_forward.1} parent=1 // pred_check_branch
      %1970 = sbr.rel (0) target = $region69
    $region68: #{net_forward.1} parent=1 // pred_region
      _
    $region69: #{net_forward.1} parent=1 // pred_fallthru
      _
    // Predicated region
    $region70: #{net_forward.1} parent=1 // pred_check
      _
    $region71: #{net_forward.1} parent=1 // pred_check_branch
      %1972 = sbr.rel (0) target = $region73
    $region72: #{net_forward.1} parent=1 // pred_region
      _
    $region73: #{net_forward.1} parent=1 // pred_fallthru
      _
    %1973 = vsyncpa [#allocation6], 1
    %1974 = vsyncpa [#allocation8], 1

</llo_original>
